<compile_context>
chip_gen: v5e
topology: v5e:2x2
jax: 0.10.0
libtpu: 0.0.40
codegen_flags: <defaults>
</compile_context>

<pallas_src>
import numpy as np
import jax
import jax.numpy as jnp
from jax import lax
from jax.experimental import pallas as pl
from jax.experimental.pallas import tpu as pltpu


# ---------------------------------------------------------------------------
# shifted ortho DFT matrix:  v -> fftshift(fft(ifftshift(v), norm='ortho')).
# For even n the shifted iDFT matrix is the elementwise conjugate of this one.
# ---------------------------------------------------------------------------
def _shifted_dft_matrix(n):
    eye = np.eye(n)
    return np.fft.fftshift(
        np.fft.fft(np.fft.ifftshift(eye, axes=0), axis=0, norm="ortho"), axes=0)


# ---------------------------------------------------------------------------
# Kernel 1 (per batch, "parallel" grid axis):
#   gx = A^H (A x - b)  and per-batch scalars [ ||gx||^2 , ||A gx||^2 ].
# Layouts: image domain coil-major (C, H, W); k-space flat (C*H, W).
# ---------------------------------------------------------------------------
def _grad_kernel(xr_ref, xi_ref, sr_ref, si_ref, br_ref, bi_ref, mk_ref,
                 fhr_ref, fhi_ref, fwtr_ref, fwti_ref,
                 gxr_ref, gxi_ref, scal_ref):
    f32, bf16 = jnp.float32, jnp.bfloat16
    C, H, W = sr_ref.shape[1], sr_ref.shape[2], sr_ref.shape[3]

    xr, xi = xr_ref[0], xi_ref[0]            # (H, W) f32
    sr, si = sr_ref[0], si_ref[0]            # (C, H, W) bf16 coil maps
    br, bi = br_ref[0], bi_ref[0]            # (C*H, W) bf16, pre-masked k-space
    mask = mk_ref[...]                       # (H, W) f32 (0/1)

    # constants, prepared once per grid step (hoisted by tracing)
    fhr = jnp.broadcast_to(fhr_ref[...], (C, H, H))      # (C, H, H) bf16
    fhi = jnp.broadcast_to(fhi_ref[...], (C, H, H))
    fwtr, fwti = fwtr_ref[...], fwti_ref[...]            # (W, W) bf16
    maskf = jnp.concatenate([mask] * C, axis=0)          # (C*H, W) f32

    # real MXU matmuls: bf16 operands, f32 accumulation
    bdims = (((2,), (1,)), ((0,), (0,)))     # contract H_in, batch over coils
    def hmm(m, v):                           # (C,H,H) @ (C,H,W) -> (C,H,W)
        return lax.dot_general(m, v.astype(bf16), bdims,
                               preferred_element_type=f32)

    def wmm(v, m):                           # (C*H,W) @ (W,W)  -> (C*H,W)
        return jnp.dot(v.astype(bf16), m, preferred_element_type=f32)

    def forward_A(ur, ui):
        """A u = M F S u for all coils; returns masked k-space (C*H, W), f32."""
        # S: coil expansion (leading-dim broadcast multiply)
        yr = (ur[None] * sr - ui[None] * si).astype(bf16)
        yi = (ur[None] * si + ui[None] * sr).astype(bf16)
        # F along H: batched complex matmul (4 real matmuls)
        tr = hmm(fhr, yr) - hmm(fhi, yi)
        ti = hmm(fhr, yi) + hmm(fhi, yr)
        # layout-preserving flatten (H % 8 == 0), then F along W as one matmul
        tr = tr.reshape(C * H, W).astype(bf16)
        ti = ti.reshape(C * H, W).astype(bf16)
        kr = wmm(tr, fwtr) - wmm(ti, fwti)
        ki = wmm(tr, fwti) + wmm(ti, fwtr)
        return kr * maskf, ki * maskf        # M

    # ---- pass 1: gradient  gx = S^H F^H (M F S x - M b) --------------------
    kr, ki = forward_A(xr, xi)
    rr = (kr - br).astype(bf16)              # b pre-masked in the wrapper
    ri = (ki - bi).astype(bf16)
    # F^H along W: right-multiply by conj(FWT)
    zr = wmm(rr, fwtr) + wmm(ri, fwti)
    zi = wmm(ri, fwtr) - wmm(rr, fwti)
    zr = zr.reshape(C, H, W).astype(bf16)
    zi = zi.reshape(C, H, W).astype(bf16)
    # F^H along H: left-multiply by conj(FH), batched over coils
    ur = hmm(fhr, zr) + hmm(fhi, zi)
    ui = hmm(fhr, zi) - hmm(fhi, zr)
    # S^H: conj(sMaps) * img, summed over the coil (leading) axis
    gr = jnp.sum(sr * ur + si * ui, axis=0)
    gi = jnp.sum(sr * ui - si * ur, axis=0)
    gxr_ref[0] = gr
    gxi_ref[0] = gi
    gxnorm = jnp.sum(gr * gr + gi * gi)

    # ---- pass 2: ||A gx||^2  (Re<r, A gx> == ||gx||^2 exactly) -------------
    qr, qi = forward_A(gr, gi)
    pp = jnp.sum(qr * qr + qi * qi)

    scal_ref[0] = jnp.concatenate(
        [jnp.full((1, 128), gxnorm, f32), jnp.full((1, 128), pp, f32)], axis=0)


# ---------------------------------------------------------------------------
# Kernel 2: xNew = x - alpha * gx, directly on the (B,H,W) real/imag planes
# ---------------------------------------------------------------------------
def _update_kernel(alpha_ref, xr_ref, xi_ref, gr_ref, gi_ref, or_ref, oi_ref):
    a = alpha_ref[0]
    or_ref[...] = xr_ref[...] - a * gr_ref[...]
    oi_ref[...] = xi_ref[...] - a * gi_ref[...]


# ---------------------------------------------------------------------------
# Wrapper (mirrors grad_desc.forward with W = Wt = identity)
# ---------------------------------------------------------------------------
def grad_desc_forward(x, sMaps, mask, b, *, alpha=0.1, linesearch=True):
    """x: (B,H,W) c64, sMaps: (B,H,W,C) c64, mask: (H,W) 0/1, b: (B,H,W,C) c64.

    Returns (xNew, gx).  The PyTorch module returns xNew; gx is exposed here
    for validation only.
    """
    B, H, W = x.shape
    C = sMaps.shape[-1]
    assert H % 8 == 0 and W % 8 == 0, "H and W must be multiples of 8"
    f32, bf16 = jnp.float32, jnp.bfloat16

    # coil-major / pre-masked layouts (pure layout plumbing, done once in XLA)
    s_c = jnp.moveaxis(sMaps, -1, 1)                           # (B, C, H, W)
    b_m = jnp.moveaxis(b * mask[None, :, :, None], -1, 1)      # M b
    b_f = b_m.reshape(B, C * H, W)                             # flat k-space

    xr, xi = x.real.astype(f32), x.imag.astype(f32)
    sr, si = s_c.real.astype(bf16), s_c.imag.astype(bf16)
    br_, bi_ = b_f.real.astype(bf16), b_f.imag.astype(bf16)
    mask_f = mask.astype(f32)

    FH = _shifted_dft_matrix(H)
    FW = _shifted_dft_matrix(W)
    FHr, FHi = jnp.asarray(FH.real, bf16), jnp.asarray(FH.imag, bf16)
    FWTr, FWTi = jnp.asarray(FW.T.real, bf16), jnp.asarray(FW.T.imag, bf16)

    img_spec = pl.BlockSpec((1, H, W), lambda i: (i, 0, 0))
    coil_spec = pl.BlockSpec((1, C, H, W), lambda i: (i, 0, 0, 0))
    ksp_spec = pl.BlockSpec((1, C * H, W), lambda i: (i, 0, 0))
    mask_spec = pl.BlockSpec((H, W), lambda i: (0, 0))
    matH_spec = pl.BlockSpec((H, H), lambda i: (0, 0))
    matW_spec = pl.BlockSpec((W, W), lambda i: (0, 0))
    scal_spec = pl.BlockSpec((1, 2, 128), lambda i: (i, 0, 0))

    grid_spec = pltpu.PrefetchScalarGridSpec(
        num_scalar_prefetch=0,
        grid=(B,),
        in_specs=[img_spec, img_spec, coil_spec, coil_spec,
                  ksp_spec, ksp_spec, mask_spec,
                  matH_spec, matH_spec, matW_spec, matW_spec],
        out_specs=[img_spec, img_spec, scal_spec],
    )

    # generation-aware VMEM limit (v7x: 64 MiB physical, v5e/v6e: 128 MiB)
    kind = ""
    try:
        kind = jax.devices()[0].device_kind.lower()
    except Exception:
        pass
    if "v7" in kind:
        cap = 56 << 20
    elif ("v5" in kind) or ("v6" in kind):
        cap = 100 << 20
    else:
        cap = None                       # unknown chip: keep the default limit
    work = (2 * (2 * H * W * 4 + 4 * C * H * W * 2      # x + sMaps + b (x2 bufs)
                 + H * W * 4 + 2 * (H * H + W * W) * 2  # mask + DFT matrices
                 + 2 * H * W * 4 + 2 * 128 * 4)         # outputs
            + 2 * C * H * H * 2                         # broadcast FH (re+im)
            + 14 * C * H * W * 4)                       # f32 k-space temporaries
    vmem_limit = (None if cap is None
                  else int(min(max(work + (4 << 20), 32 << 20), cap)))

    gxr, gxi, scal = pl.pallas_call(
        _grad_kernel,
        grid_spec=grid_spec,
        out_shape=(jax.ShapeDtypeStruct((B, H, W), f32),
                   jax.ShapeDtypeStruct((B, H, W), f32),
                   jax.ShapeDtypeStruct((B, 2, 128), f32)),
        compiler_params=pltpu.CompilerParams(
            dimension_semantics=("parallel",),
            vmem_limit_bytes=vmem_limit),
    )(xr, xi, sr, si, br_, bi_, mask_f, FHr, FHi, FWTr, FWTi)

    gxnorm = jnp.sum(scal[:, 0, 0])
    pp = jnp.sum(scal[:, 1, 0])

    if linesearch:
        # Armijo:  obj(x - a gx) < obj(x) - a*c*||gx||^2.  A is linear and
        # Re<r, A gx> = ||gx||^2 (gx = A^H r), so the condition reduces to
        #   0.5 * a * ||A gx||^2 < (1 - c) * ||gx||^2,
        # making the number of backtracks closed form (no 250-iteration loop).
        a0 = jnp.float32(0.5)
        rho = jnp.float32(0.9)
        c_ls = jnp.float32(0.9)
        max_bt = jnp.float32(249.0)      # 250 iterations max in the reference
        pp_safe = jnp.where(pp > 0, pp, jnp.float32(1.0))
        ratio = (2.0 * (1.0 - c_ls) * gxnorm) / (a0 * pp_safe)
        ratio_safe = jnp.where(ratio > 0, ratio, jnp.float32(1.0))
        k = jnp.floor(jnp.log(ratio_safe) / jnp.log(rho)) + 1.0
        k = jnp.clip(k, 0.0, max_bt)
        k = jnp.where(ratio > 0, k, max_bt)
        k = jnp.where(pp > 0, k,
                      jnp.where(gxnorm > 0, jnp.float32(0.0), max_bt))
        alpha_final = a0 * rho ** k
    else:
        alpha_final = jnp.float32(alpha)

    # ---- xNew = x - alpha * gx (no flatten/concat/pad round trip) ----------
    alpha_arr = jnp.reshape(alpha_final, (1,)).astype(f32)
    upd_spec = pl.BlockSpec((1, H, W), lambda i, a_ref: (i, 0, 0))
    xnr, xni = pl.pallas_call(
        _update_kernel,
        grid_spec=pltpu.PrefetchScalarGridSpec(
            num_scalar_prefetch=1,
            grid=(B,),
            in_specs=[upd_spec, upd_spec, upd_spec, upd_spec],
            out_specs=[upd_spec, upd_spec]),
        out_shape=(jax.ShapeDtypeStruct((B, H, W), f32),
                   jax.ShapeDtypeStruct((B, H, W), f32)),
        compiler_params=pltpu.CompilerParams(
            dimension_semantics=("parallel",)),
    )(alpha_arr, xr, xi, gxr, gxi)

    xNew = lax.complex(xnr, xni)
    gx = lax.complex(gxr, gxi)
    return xNew, gx


# ---------------------------------------------------------------------------
# pure-JAX reference (mirrors the torch ops), used only as a sanity check
# ---------------------------------------------------------------------------
def _ref_A(x, sMaps, mask):
    y = x[..., None] * sMaps
    yk = jnp.fft.fftshift(
        jnp.fft.fftn(jnp.fft.ifftshift(y, axes=(-3, -2)),
                     axes=(-3, -2), norm="ortho"), axes=(-3, -2))
    return yk * mask[None, :, :, None]


def _ref_At(k, sMaps, mask):
    k = k * mask[None, :, :, None]
    img = jnp.fft.fftshift(
        jnp.fft.ifftn(jnp.fft.ifftshift(k, axes=(-3, -2)),
                      axes=(-3, -2), norm="ortho"), axes=(-3, -2))
    return jnp.sum(jnp.conj(sMaps) * img, axis=-1)


if __name__ == "__main__":
    B, C, H, W = 2, 4, 16, 16
    key = jax.random.PRNGKey(0)
    ks = jax.random.split(key, 7)
    x = (jax.random.normal(ks[0], (B, H, W))
         + 1j * jax.random.normal(ks[1], (B, H, W))).astype(jnp.complex64)
    sMaps = (jax.random.normal(ks[2], (B, H, W, C))
             + 1j * jax.random.normal(ks[3], (B, H, W, C))).astype(jnp.complex64)
    b = (jax.random.normal(ks[4], (B, H, W, C))
         + 1j * jax.random.normal(ks[5], (B, H, W, C))).astype(jnp.complex64)
    mask = (jax.random.uniform(ks[6], (H, W)) > 0.4).astype(jnp.float32)

    xNew, gx = grad_desc_forward(x, sMaps, mask, b, alpha=0.1, linesearch=True)
    jax.block_until_ready((xNew, gx))

    # sanity check of the in-kernel (bf16 MXU) gradient against a jnp.fft ref
    gx_ref = _ref_At(_ref_A(x, sMaps, mask) - b, sMaps, mask)
    num = np.linalg.norm(np.asarray(gx - gx_ref).ravel())
    den = np.linalg.norm(np.asarray(gx_ref).ravel())
    assert den > 0 and num / den < 5e-2, f"gx relative L2 error: {num / den}"
    assert np.all(np.isfinite(np.asarray(xNew.real)))
    assert np.all(np.isfinite(np.asarray(xNew.imag)))
    print("KERNEL_OK")
</pallas_src>

<mosaic_0001>
module attributes {stable_mosaic.version = 11 : i64} {
  func.func @_grad_kernel(%arg0: i32, %arg1: memref<1x16x16xf32, #tpu.memory_space<vmem>>, %arg2: memref<1x16x16xf32, #tpu.memory_space<vmem>>, %arg3: memref<1x4x16x16xbf16, #tpu.memory_space<vmem>>, %arg4: memref<1x4x16x16xbf16, #tpu.memory_space<vmem>>, %arg5: memref<1x64x16xbf16, #tpu.memory_space<vmem>>, %arg6: memref<1x64x16xbf16, #tpu.memory_space<vmem>>, %arg7: memref<16x16xf32, #tpu.memory_space<vmem>>, %arg8: memref<16x16xbf16, #tpu.memory_space<vmem>>, %arg9: memref<16x16xbf16, #tpu.memory_space<vmem>>, %arg10: memref<16x16xbf16, #tpu.memory_space<vmem>>, %arg11: memref<16x16xbf16, #tpu.memory_space<vmem>>, %arg12: memref<1x16x16xf32, #tpu.memory_space<vmem>>, %arg13: memref<1x16x16xf32, #tpu.memory_space<vmem>>, %arg14: memref<1x2x128xf32, #tpu.memory_space<vmem>>) attributes {dimension_semantics = [#tpu.dimension_semantics<parallel>], iteration_bounds = array<i64: 2>, scalar_prefetch = 0 : i64, scratch_operands = 0 : i64, tpu.core_type = #tpu.core_type<tc>, window_params = [{transform_indices = @transform_0, window_bounds = array<i64: 1, 16, 16>}, {transform_indices = @transform_1, window_bounds = array<i64: 1, 16, 16>}, {transform_indices = @transform_2, window_bounds = array<i64: 1, 4, 16, 16>}, {transform_indices = @transform_3, window_bounds = array<i64: 1, 4, 16, 16>}, {transform_indices = @transform_4, window_bounds = array<i64: 1, 64, 16>}, {transform_indices = @transform_5, window_bounds = array<i64: 1, 64, 16>}, {pipeline_mode = #tpu.pipeline_mode<synchronous>, transform_indices = @transform_6, window_bounds = array<i64: 16, 16>}, {pipeline_mode = #tpu.pipeline_mode<synchronous>, transform_indices = @transform_7, window_bounds = array<i64: 16, 16>}, {pipeline_mode = #tpu.pipeline_mode<synchronous>, transform_indices = @transform_8, window_bounds = array<i64: 16, 16>}, {pipeline_mode = #tpu.pipeline_mode<synchronous>, transform_indices = @transform_9, window_bounds = array<i64: 16, 16>}, {pipeline_mode = #tpu.pipeline_mode<synchronous>, transform_indices = @transform_10, window_bounds = array<i64: 16, 16>}, {transform_indices = @transform_11, window_bounds = array<i64: 1, 16, 16>}, {transform_indices = @transform_12, window_bounds = array<i64: 1, 16, 16>}, {transform_indices = @transform_13, window_bounds = array<i64: 1, 2, 128>}]} {
    %c0 = arith.constant 0 : index
    %c0_0 = arith.constant 0 : index
    %c0_1 = arith.constant 0 : index
    %0 = vector.load %arg1[%c0, %c0_0, %c0_1] : memref<1x16x16xf32, #tpu.memory_space<vmem>>, vector<1x16x16xf32>
    %1 = vector.shape_cast %0 : vector<1x16x16xf32> to vector<16x16xf32>
    %c0_2 = arith.constant 0 : index
    %c0_3 = arith.constant 0 : index
    %c0_4 = arith.constant 0 : index
    %2 = vector.load %arg2[%c0_2, %c0_3, %c0_4] : memref<1x16x16xf32, #tpu.memory_space<vmem>>, vector<1x16x16xf32>
    %3 = vector.shape_cast %2 : vector<1x16x16xf32> to vector<16x16xf32>
    %c0_5 = arith.constant 0 : index
    %c0_6 = arith.constant 0 : index
    %c0_7 = arith.constant 0 : index
    %c0_8 = arith.constant 0 : index
    %4 = vector.load %arg3[%c0_5, %c0_6, %c0_7, %c0_8] : memref<1x4x16x16xbf16, #tpu.memory_space<vmem>>, vector<1x4x16x16xbf16>
    %5 = vector.shape_cast %4 : vector<1x4x16x16xbf16> to vector<4x16x16xbf16>
    %c0_9 = arith.constant 0 : index
    %c0_10 = arith.constant 0 : index
    %c0_11 = arith.constant 0 : index
    %c0_12 = arith.constant 0 : index
    %6 = vector.load %arg4[%c0_9, %c0_10, %c0_11, %c0_12] : memref<1x4x16x16xbf16, #tpu.memory_space<vmem>>, vector<1x4x16x16xbf16>
    %7 = vector.shape_cast %6 : vector<1x4x16x16xbf16> to vector<4x16x16xbf16>
    %c0_13 = arith.constant 0 : index
    %c0_14 = arith.constant 0 : index
    %c0_15 = arith.constant 0 : index
    %8 = vector.load %arg5[%c0_13, %c0_14, %c0_15] : memref<1x64x16xbf16, #tpu.memory_space<vmem>>, vector<1x64x16xbf16>
    %9 = vector.shape_cast %8 : vector<1x64x16xbf16> to vector<64x16xbf16>
    %c0_16 = arith.constant 0 : index
    %c0_17 = arith.constant 0 : index
    %c0_18 = arith.constant 0 : index
    %10 = vector.load %arg6[%c0_16, %c0_17, %c0_18] : memref<1x64x16xbf16, #tpu.memory_space<vmem>>, vector<1x64x16xbf16>
    %11 = vector.shape_cast %10 : vector<1x64x16xbf16> to vector<64x16xbf16>
    %c0_19 = arith.constant 0 : index
    %c0_20 = arith.constant 0 : index
    %12 = vector.load %arg7[%c0_19, %c0_20] : memref<16x16xf32, #tpu.memory_space<vmem>>, vector<16x16xf32>
    %c0_21 = arith.constant 0 : index
    %c0_22 = arith.constant 0 : index
    %13 = vector.load %arg8[%c0_21, %c0_22] : memref<16x16xbf16, #tpu.memory_space<vmem>>, vector<16x16xbf16>
    %14 = vector.shape_cast %13 : vector<16x16xbf16> to vector<1x16x16xbf16>
    %15 = vector.broadcast %14 : vector<1x16x16xbf16> to vector<4x16x16xbf16>
    %c0_23 = arith.constant 0 : index
    %c0_24 = arith.constant 0 : index
    %16 = vector.load %arg9[%c0_23, %c0_24] : memref<16x16xbf16, #tpu.memory_space<vmem>>, vector<16x16xbf16>
    %17 = vector.shape_cast %16 : vector<16x16xbf16> to vector<1x16x16xbf16>
    %18 = vector.broadcast %17 : vector<1x16x16xbf16> to vector<4x16x16xbf16>
    %c0_25 = arith.constant 0 : index
    %c0_26 = arith.constant 0 : index
    %19 = vector.load %arg10[%c0_25, %c0_26] : memref<16x16xbf16, #tpu.memory_space<vmem>>, vector<16x16xbf16>
    %c0_27 = arith.constant 0 : index
    %c0_28 = arith.constant 0 : index
    %20 = vector.load %arg11[%c0_27, %c0_28] : memref<16x16xbf16, #tpu.memory_space<vmem>>, vector<16x16xbf16>
    %21 = tpu.concatenate %12, %12, %12, %12 in 0 : vector<16x16xf32>, vector<16x16xf32>, vector<16x16xf32>, vector<16x16xf32> -> vector<64x16xf32>
    %22 = vector.shape_cast %1 : vector<16x16xf32> to vector<1x16x16xf32>
    %23 = arith.extf %5 : vector<4x16x16xbf16> to vector<4x16x16xf32>
    %24 = vector.broadcast %22 : vector<1x16x16xf32> to vector<4x16x16xf32>
    %25 = arith.mulf %24, %23 : vector<4x16x16xf32>
    %26 = vector.shape_cast %3 : vector<16x16xf32> to vector<1x16x16xf32>
    %27 = arith.extf %7 : vector<4x16x16xbf16> to vector<4x16x16xf32>
    %28 = vector.broadcast %26 : vector<1x16x16xf32> to vector<4x16x16xf32>
    %29 = arith.mulf %28, %27 : vector<4x16x16xf32>
    %30 = arith.subf %25, %29 : vector<4x16x16xf32>
    %31 = arith.truncf %30 : vector<4x16x16xf32> to vector<4x16x16xbf16>
    %32 = vector.shape_cast %1 : vector<16x16xf32> to vector<1x16x16xf32>
    %33 = arith.extf %7 : vector<4x16x16xbf16> to vector<4x16x16xf32>
    %34 = vector.broadcast %32 : vector<1x16x16xf32> to vector<4x16x16xf32>
    %35 = arith.mulf %34, %33 : vector<4x16x16xf32>
    %36 = vector.shape_cast %3 : vector<16x16xf32> to vector<1x16x16xf32>
    %37 = arith.extf %5 : vector<4x16x16xbf16> to vector<4x16x16xf32>
    %38 = vector.broadcast %36 : vector<1x16x16xf32> to vector<4x16x16xf32>
    %39 = arith.mulf %38, %37 : vector<4x16x16xf32>
    %40 = arith.addf %35, %39 : vector<4x16x16xf32>
    %41 = arith.truncf %40 : vector<4x16x16xf32> to vector<4x16x16xbf16>
    %cst = arith.constant dense<0.000000e+00> : vector<4x16x16xf32>
    %42 = tpu.matmul %15, %31, %cst {dimension_numbers = #tpu.dot_dimension_numbers<[2], [1], [1], [2], [0, 0, 0, 1, 1, 2], [0], [0]>} : vector<4x16x16xbf16>, vector<4x16x16xbf16>, vector<4x16x16xf32> -> vector<4x16x16xf32>
    %cst_29 = arith.constant dense<0.000000e+00> : vector<4x16x16xf32>
    %43 = tpu.matmul %18, %41, %cst_29 {dimension_numbers = #tpu.dot_dimension_numbers<[2], [1], [1], [2], [0, 0, 0, 1, 1, 2], [0], [0]>} : vector<4x16x16xbf16>, vector<4x16x16xbf16>, vector<4x16x16xf32> -> vector<4x16x16xf32>
    %44 = arith.subf %42, %43 : vector<4x16x16xf32>
    %cst_30 = arith.constant dense<0.000000e+00> : vector<4x16x16xf32>
    %45 = tpu.matmul %15, %41, %cst_30 {dimension_numbers = #tpu.dot_dimension_numbers<[2], [1], [1], [2], [0, 0, 0, 1, 1, 2], [0], [0]>} : vector<4x16x16xbf16>, vector<4x16x16xbf16>, vector<4x16x16xf32> -> vector<4x16x16xf32>
    %cst_31 = arith.constant dense<0.000000e+00> : vector<4x16x16xf32>
    %46 = tpu.matmul %18, %31, %cst_31 {dimension_numbers = #tpu.dot_dimension_numbers<[2], [1], [1], [2], [0, 0, 0, 1, 1, 2], [0], [0]>} : vector<4x16x16xbf16>, vector<4x16x16xbf16>, vector<4x16x16xf32> -> vector<4x16x16xf32>
    %47 = arith.addf %45, %46 : vector<4x16x16xf32>
    %48 = vector.shape_cast %44 : vector<4x16x16xf32> to vector<64x16xf32>
    %49 = arith.truncf %48 : vector<64x16xf32> to vector<64x16xbf16>
    %50 = vector.shape_cast %47 : vector<4x16x16xf32> to vector<64x16xf32>
    %51 = arith.truncf %50 : vector<64x16xf32> to vector<64x16xbf16>
    %cst_32 = arith.constant dense<0.000000e+00> : vector<64x16xf32>
    %52 = tpu.matmul %49, %19, %cst_32 {dimension_numbers = #tpu.dot_dimension_numbers<[1], [0], [0], [1], [0, 0, 1, 1], [], []>} : vector<64x16xbf16>, vector<16x16xbf16>, vector<64x16xf32> -> vector<64x16xf32>
    %cst_33 = arith.constant dense<0.000000e+00> : vector<64x16xf32>
    %53 = tpu.matmul %51, %20, %cst_33 {dimension_numbers = #tpu.dot_dimension_numbers<[1], [0], [0], [1], [0, 0, 1, 1], [], []>} : vector<64x16xbf16>, vector<16x16xbf16>, vector<64x16xf32> -> vector<64x16xf32>
    %54 = arith.subf %52, %53 : vector<64x16xf32>
    %cst_34 = arith.constant dense<0.000000e+00> : vector<64x16xf32>
    %55 = tpu.matmul %49, %20, %cst_34 {dimension_numbers = #tpu.dot_dimension_numbers<[1], [0], [0], [1], [0, 0, 1, 1], [], []>} : vector<64x16xbf16>, vector<16x16xbf16>, vector<64x16xf32> -> vector<64x16xf32>
    %cst_35 = arith.constant dense<0.000000e+00> : vector<64x16xf32>
    %56 = tpu.matmul %51, %19, %cst_35 {dimension_numbers = #tpu.dot_dimension_numbers<[1], [0], [0], [1], [0, 0, 1, 1], [], []>} : vector<64x16xbf16>, vector<16x16xbf16>, vector<64x16xf32> -> vector<64x16xf32>
    %57 = arith.addf %55, %56 : vector<64x16xf32>
    %58 = arith.mulf %54, %21 : vector<64x16xf32>
    %59 = arith.mulf %57, %21 : vector<64x16xf32>
    %60 = arith.extf %9 : vector<64x16xbf16> to vector<64x16xf32>
    %61 = arith.subf %58, %60 : vector<64x16xf32>
    %62 = arith.truncf %61 : vector<64x16xf32> to vector<64x16xbf16>
    %63 = arith.extf %11 : vector<64x16xbf16> to vector<64x16xf32>
    %64 = arith.subf %59, %63 : vector<64x16xf32>
    %65 = arith.truncf %64 : vector<64x16xf32> to vector<64x16xbf16>
    %cst_36 = arith.constant dense<0.000000e+00> : vector<64x16xf32>
    %66 = tpu.matmul %62, %19, %cst_36 {dimension_numbers = #tpu.dot_dimension_numbers<[1], [0], [0], [1], [0, 0, 1, 1], [], []>} : vector<64x16xbf16>, vector<16x16xbf16>, vector<64x16xf32> -> vector<64x16xf32>
    %cst_37 = arith.constant dense<0.000000e+00> : vector<64x16xf32>
    %67 = tpu.matmul %65, %20, %cst_37 {dimension_numbers = #tpu.dot_dimension_numbers<[1], [0], [0], [1], [0, 0, 1, 1], [], []>} : vector<64x16xbf16>, vector<16x16xbf16>, vector<64x16xf32> -> vector<64x16xf32>
    %68 = arith.addf %66, %67 : vector<64x16xf32>
    %cst_38 = arith.constant dense<0.000000e+00> : vector<64x16xf32>
    %69 = tpu.matmul %65, %19, %cst_38 {dimension_numbers = #tpu.dot_dimension_numbers<[1], [0], [0], [1], [0, 0, 1, 1], [], []>} : vector<64x16xbf16>, vector<16x16xbf16>, vector<64x16xf32> -> vector<64x16xf32>
    %cst_39 = arith.constant dense<0.000000e+00> : vector<64x16xf32>
    %70 = tpu.matmul %62, %20, %cst_39 {dimension_numbers = #tpu.dot_dimension_numbers<[1], [0], [0], [1], [0, 0, 1, 1], [], []>} : vector<64x16xbf16>, vector<16x16xbf16>, vector<64x16xf32> -> vector<64x16xf32>
    %71 = arith.subf %69, %70 : vector<64x16xf32>
    %72 = vector.shape_cast %68 : vector<64x16xf32> to vector<4x16x16xf32>
    %73 = arith.truncf %72 : vector<4x16x16xf32> to vector<4x16x16xbf16>
    %74 = vector.shape_cast %71 : vector<64x16xf32> to vector<4x16x16xf32>
    %75 = arith.truncf %74 : vector<4x16x16xf32> to vector<4x16x16xbf16>
    %cst_40 = arith.constant dense<0.000000e+00> : vector<4x16x16xf32>
    %76 = tpu.matmul %15, %73, %cst_40 {dimension_numbers = #tpu.dot_dimension_numbers<[2], [1], [1], [2], [0, 0, 0, 1, 1, 2], [0], [0]>} : vector<4x16x16xbf16>, vector<4x16x16xbf16>, vector<4x16x16xf32> -> vector<4x16x16xf32>
    %cst_41 = arith.constant dense<0.000000e+00> : vector<4x16x16xf32>
    %77 = tpu.matmul %18, %75, %cst_41 {dimension_numbers = #tpu.dot_dimension_numbers<[2], [1], [1], [2], [0, 0, 0, 1, 1, 2], [0], [0]>} : vector<4x16x16xbf16>, vector<4x16x16xbf16>, vector<4x16x16xf32> -> vector<4x16x16xf32>
    %78 = arith.addf %76, %77 : vector<4x16x16xf32>
    %cst_42 = arith.constant dense<0.000000e+00> : vector<4x16x16xf32>
    %79 = tpu.matmul %15, %75, %cst_42 {dimension_numbers = #tpu.dot_dimension_numbers<[2], [1], [1], [2], [0, 0, 0, 1, 1, 2], [0], [0]>} : vector<4x16x16xbf16>, vector<4x16x16xbf16>, vector<4x16x16xf32> -> vector<4x16x16xf32>
    %cst_43 = arith.constant dense<0.000000e+00> : vector<4x16x16xf32>
    %80 = tpu.matmul %18, %73, %cst_43 {dimension_numbers = #tpu.dot_dimension_numbers<[2], [1], [1], [2], [0, 0, 0, 1, 1, 2], [0], [0]>} : vector<4x16x16xbf16>, vector<4x16x16xbf16>, vector<4x16x16xf32> -> vector<4x16x16xf32>
    %81 = arith.subf %79, %80 : vector<4x16x16xf32>
    %82 = arith.extf %5 : vector<4x16x16xbf16> to vector<4x16x16xf32>
    %83 = arith.mulf %82, %78 : vector<4x16x16xf32>
    %84 = arith.extf %7 : vector<4x16x16xbf16> to vector<4x16x16xf32>
    %85 = arith.mulf %84, %81 : vector<4x16x16xf32>
    %86 = arith.addf %83, %85 : vector<4x16x16xf32>
    %cst_44 = arith.constant dense<0.000000e+00> : vector<16x16xf32>
    %87 = vector.multi_reduction <add>, %86, %cst_44 [0] : vector<4x16x16xf32> to vector<16x16xf32>
    %88 = arith.extf %5 : vector<4x16x16xbf16> to vector<4x16x16xf32>
    %89 = arith.mulf %88, %81 : vector<4x16x16xf32>
    %90 = arith.extf %7 : vector<4x16x16xbf16> to vector<4x16x16xf32>
    %91 = arith.mulf %90, %78 : vector<4x16x16xf32>
    %92 = arith.subf %89, %91 : vector<4x16x16xf32>
    %cst_45 = arith.constant dense<0.000000e+00> : vector<16x16xf32>
    %93 = vector.multi_reduction <add>, %92, %cst_45 [0] : vector<4x16x16xf32> to vector<16x16xf32>
    %c0_46 = arith.constant 0 : index
    %c0_47 = arith.constant 0 : index
    %c0_48 = arith.constant 0 : index
    %94 = vector.load %arg12[%c0_46, %c0_47, %c0_48] : memref<1x16x16xf32, #tpu.memory_space<vmem>>, vector<1x16x16xf32>
    %95 = vector.shape_cast %94 : vector<1x16x16xf32> to vector<16x16xf32>
    %96 = vector.shape_cast %87 : vector<16x16xf32> to vector<1x16x16xf32>
    tpu.vector_store %arg12[%c0_46, %c0_47, %c0_48], %96 {strides = array<i32>} : memref<1x16x16xf32, #tpu.memory_space<vmem>>, vector<1x16x16xf32>,
    %c0_49 = arith.constant 0 : index
    %c0_50 = arith.constant 0 : index
    %c0_51 = arith.constant 0 : index
    %97 = vector.load %arg13[%c0_49, %c0_50, %c0_51] : memref<1x16x16xf32, #tpu.memory_space<vmem>>, vector<1x16x16xf32>
    %98 = vector.shape_cast %97 : vector<1x16x16xf32> to vector<16x16xf32>
    %99 = vector.shape_cast %93 : vector<16x16xf32> to vector<1x16x16xf32>
    tpu.vector_store %arg13[%c0_49, %c0_50, %c0_51], %99 {strides = array<i32>} : memref<1x16x16xf32, #tpu.memory_space<vmem>>, vector<1x16x16xf32>,
    %100 = arith.mulf %87, %87 : vector<16x16xf32>
    %101 = arith.mulf %93, %93 : vector<16x16xf32>
    %102 = arith.addf %100, %101 : vector<16x16xf32>
    %103 = vector.shape_cast %102 : vector<16x16xf32> to vector<1x16x16xf32>
    %cst_52 = arith.constant dense<0.000000e+00> : vector<1xf32>
    %104 = vector.multi_reduction <add>, %103, %cst_52 [1, 2] : vector<1x16x16xf32> to vector<1xf32>
    %105 = vector.shape_cast %104 : vector<1xf32> to vector<1x1x1xf32>
    %106 = vector.extract %105[0, 0, 0] : f32 from vector<1x1x1xf32>
    %107 = vector.shape_cast %87 : vector<16x16xf32> to vector<1x16x16xf32>
    %108 = arith.extf %5 : vector<4x16x16xbf16> to vector<4x16x16xf32>
    %109 = vector.broadcast %107 : vector<1x16x16xf32> to vector<4x16x16xf32>
    %110 = arith.mulf %109, %108 : vector<4x16x16xf32>
    %111 = vector.shape_cast %93 : vector<16x16xf32> to vector<1x16x16xf32>
    %112 = arith.extf %7 : vector<4x16x16xbf16> to vector<4x16x16xf32>
    %113 = vector.broadcast %111 : vector<1x16x16xf32> to vector<4x16x16xf32>
    %114 = arith.mulf %113, %112 : vector<4x16x16xf32>
    %115 = arith.subf %110, %114 : vector<4x16x16xf32>
    %116 = arith.truncf %115 : vector<4x16x16xf32> to vector<4x16x16xbf16>
    %117 = vector.shape_cast %87 : vector<16x16xf32> to vector<1x16x16xf32>
    %118 = arith.extf %7 : vector<4x16x16xbf16> to vector<4x16x16xf32>
    %119 = vector.broadcast %117 : vector<1x16x16xf32> to vector<4x16x16xf32>
    %120 = arith.mulf %119, %118 : vector<4x16x16xf32>
    %121 = vector.shape_cast %93 : vector<16x16xf32> to vector<1x16x16xf32>
    %122 = arith.extf %5 : vector<4x16x16xbf16> to vector<4x16x16xf32>
    %123 = vector.broadcast %121 : vector<1x16x16xf32> to vector<4x16x16xf32>
    %124 = arith.mulf %123, %122 : vector<4x16x16xf32>
    %125 = arith.addf %120, %124 : vector<4x16x16xf32>
    %126 = arith.truncf %125 : vector<4x16x16xf32> to vector<4x16x16xbf16>
    %cst_53 = arith.constant dense<0.000000e+00> : vector<4x16x16xf32>
    %127 = tpu.matmul %15, %116, %cst_53 {dimension_numbers = #tpu.dot_dimension_numbers<[2], [1], [1], [2], [0, 0, 0, 1, 1, 2], [0], [0]>} : vector<4x16x16xbf16>, vector<4x16x16xbf16>, vector<4x16x16xf32> -> vector<4x16x16xf32>
    %cst_54 = arith.constant dense<0.000000e+00> : vector<4x16x16xf32>
    %128 = tpu.matmul %18, %126, %cst_54 {dimension_numbers = #tpu.dot_dimension_numbers<[2], [1], [1], [2], [0, 0, 0, 1, 1, 2], [0], [0]>} : vector<4x16x16xbf16>, vector<4x16x16xbf16>, vector<4x16x16xf32> -> vector<4x16x16xf32>
    %129 = arith.subf %127, %128 : vector<4x16x16xf32>
    %cst_55 = arith.constant dense<0.000000e+00> : vector<4x16x16xf32>
    %130 = tpu.matmul %15, %126, %cst_55 {dimension_numbers = #tpu.dot_dimension_numbers<[2], [1], [1], [2], [0, 0, 0, 1, 1, 2], [0], [0]>} : vector<4x16x16xbf16>, vector<4x16x16xbf16>, vector<4x16x16xf32> -> vector<4x16x16xf32>
    %cst_56 = arith.constant dense<0.000000e+00> : vector<4x16x16xf32>
    %131 = tpu.matmul %18, %116, %cst_56 {dimension_numbers = #tpu.dot_dimension_numbers<[2], [1], [1], [2], [0, 0, 0, 1, 1, 2], [0], [0]>} : vector<4x16x16xbf16>, vector<4x16x16xbf16>, vector<4x16x16xf32> -> vector<4x16x16xf32>
    %132 = arith.addf %130, %131 : vector<4x16x16xf32>
    %133 = vector.shape_cast %129 : vector<4x16x16xf32> to vector<64x16xf32>
    %134 = arith.truncf %133 : vector<64x16xf32> to vector<64x16xbf16>
    %135 = vector.shape_cast %132 : vector<4x16x16xf32> to vector<64x16xf32>
    %136 = arith.truncf %135 : vector<64x16xf32> to vector<64x16xbf16>
    %cst_57 = arith.constant dense<0.000000e+00> : vector<64x16xf32>
    %137 = tpu.matmul %134, %19, %cst_57 {dimension_numbers = #tpu.dot_dimension_numbers<[1], [0], [0], [1], [0, 0, 1, 1], [], []>} : vector<64x16xbf16>, vector<16x16xbf16>, vector<64x16xf32> -> vector<64x16xf32>
    %cst_58 = arith.constant dense<0.000000e+00> : vector<64x16xf32>
    %138 = tpu.matmul %136, %20, %cst_58 {dimension_numbers = #tpu.dot_dimension_numbers<[1], [0], [0], [1], [0, 0, 1, 1], [], []>} : vector<64x16xbf16>, vector<16x16xbf16>, vector<64x16xf32> -> vector<64x16xf32>
    %139 = arith.subf %137, %138 : vector<64x16xf32>
    %cst_59 = arith.constant dense<0.000000e+00> : vector<64x16xf32>
    %140 = tpu.matmul %134, %20, %cst_59 {dimension_numbers = #tpu.dot_dimension_numbers<[1], [0], [0], [1], [0, 0, 1, 1], [], []>} : vector<64x16xbf16>, vector<16x16xbf16>, vector<64x16xf32> -> vector<64x16xf32>
    %cst_60 = arith.constant dense<0.000000e+00> : vector<64x16xf32>
    %141 = tpu.matmul %136, %19, %cst_60 {dimension_numbers = #tpu.dot_dimension_numbers<[1], [0], [0], [1], [0, 0, 1, 1], [], []>} : vector<64x16xbf16>, vector<16x16xbf16>, vector<64x16xf32> -> vector<64x16xf32>
    %142 = arith.addf %140, %141 : vector<64x16xf32>
    %143 = arith.mulf %139, %21 : vector<64x16xf32>
    %144 = arith.mulf %142, %21 : vector<64x16xf32>
    %145 = arith.mulf %143, %143 : vector<64x16xf32>
    %146 = arith.mulf %144, %144 : vector<64x16xf32>
    %147 = arith.addf %145, %146 : vector<64x16xf32>
    %148 = vector.shape_cast %147 : vector<64x16xf32> to vector<1x64x16xf32>
    %cst_61 = arith.constant dense<0.000000e+00> : vector<1xf32>
    %149 = vector.multi_reduction <add>, %148, %cst_61 [1, 2] : vector<1x64x16xf32> to vector<1xf32>
    %150 = vector.shape_cast %149 : vector<1xf32> to vector<1x1x1xf32>
    %151 = vector.extract %150[0, 0, 0] : f32 from vector<1x1x1xf32>
    %152 = vector.broadcast %106 : f32 to vector<1x128xf32>
    %153 = vector.broadcast %151 : f32 to vector<1x128xf32>
    %154 = tpu.concatenate %152, %153 in 0 : vector<1x128xf32>, vector<1x128xf32> -> vector<2x128xf32>
    %c0_62 = arith.constant 0 : index
    %c0_63 = arith.constant 0 : index
    %c0_64 = arith.constant 0 : index
    %155 = vector.load %arg14[%c0_62, %c0_63, %c0_64] : memref<1x2x128xf32, #tpu.memory_space<vmem>>, vector<1x2x128xf32>
    %156 = vector.shape_cast %155 : vector<1x2x128xf32> to vector<2x128xf32>
    %157 = vector.shape_cast %154 : vector<2x128xf32> to vector<1x2x128xf32>
    tpu.vector_store %arg14[%c0_62, %c0_63, %c0_64], %157 {strides = array<i32>} : memref<1x2x128xf32, #tpu.memory_space<vmem>>, vector<1x2x128xf32>,
    return
  }
  func.func @transform_0(%arg0: i32) -> (i32, i32, i32) {
    %c0_i32 = arith.constant 0 : i32
    %c0_i32_0 = arith.constant 0 : i32
    %c0_i32_1 = arith.constant 0 : i32
    return %arg0, %c0_i32, %c0_i32_0 : i32, i32, i32
  }
  func.func @transform_1(%arg0: i32) -> (i32, i32, i32) {
    %c0_i32 = arith.constant 0 : i32
    %c0_i32_0 = arith.constant 0 : i32
    %c0_i32_1 = arith.constant 0 : i32
    return %arg0, %c0_i32, %c0_i32_0 : i32, i32, i32
  }
  func.func @transform_2(%arg0: i32) -> (i32, i32, i32, i32) {
    %c0_i32 = arith.constant 0 : i32
    %c0_i32_0 = arith.constant 0 : i32
    %c0_i32_1 = arith.constant 0 : i32
    %c0_i32_2 = arith.constant 0 : i32
    return %arg0, %c0_i32, %c0_i32_0, %c0_i32_1 : i32, i32, i32, i32
  }
  func.func @transform_3(%arg0: i32) -> (i32, i32, i32, i32) {
    %c0_i32 = arith.constant 0 : i32
    %c0_i32_0 = arith.constant 0 : i32
    %c0_i32_1 = arith.constant 0 : i32
    %c0_i32_2 = arith.constant 0 : i32
    return %arg0, %c0_i32, %c0_i32_0, %c0_i32_1 : i32, i32, i32, i32
  }
  func.func @transform_4(%arg0: i32) -> (i32, i32, i32) {
    %c0_i32 = arith.constant 0 : i32
    %c0_i32_0 = arith.constant 0 : i32
    %c0_i32_1 = arith.constant 0 : i32
    return %arg0, %c0_i32, %c0_i32_0 : i32, i32, i32
  }
  func.func @transform_5(%arg0: i32) -> (i32, i32, i32) {
    %c0_i32 = arith.constant 0 : i32
    %c0_i32_0 = arith.constant 0 : i32
    %c0_i32_1 = arith.constant 0 : i32
    return %arg0, %c0_i32, %c0_i32_0 : i32, i32, i32
  }
  func.func @transform_6(%arg0: i32) -> (i32, i32) {
    %c0_i32 = arith.constant 0 : i32
    %c0_i32_0 = arith.constant 0 : i32
    %c0_i32_1 = arith.constant 0 : i32
    return %c0_i32, %c0_i32_0 : i32, i32
  }
  func.func @transform_7(%arg0: i32) -> (i32, i32) {
    %c0_i32 = arith.constant 0 : i32
    %c0_i32_0 = arith.constant 0 : i32
    %c0_i32_1 = arith.constant 0 : i32
    return %c0_i32, %c0_i32_0 : i32, i32
  }
  func.func @transform_8(%arg0: i32) -> (i32, i32) {
    %c0_i32 = arith.constant 0 : i32
    %c0_i32_0 = arith.constant 0 : i32
    %c0_i32_1 = arith.constant 0 : i32
    return %c0_i32, %c0_i32_0 : i32, i32
  }
  func.func @transform_9(%arg0: i32) -> (i32, i32) {
    %c0_i32 = arith.constant 0 : i32
    %c0_i32_0 = arith.constant 0 : i32
    %c0_i32_1 = arith.constant 0 : i32
    return %c0_i32, %c0_i32_0 : i32, i32
  }
  func.func @transform_10(%arg0: i32) -> (i32, i32) {
    %c0_i32 = arith.constant 0 : i32
    %c0_i32_0 = arith.constant 0 : i32
    %c0_i32_1 = arith.constant 0 : i32
    return %c0_i32, %c0_i32_0 : i32, i32
  }
  func.func @transform_11(%arg0: i32) -> (i32, i32, i32) {
    %c0_i32 = arith.constant 0 : i32
    %c0_i32_0 = arith.constant 0 : i32
    %c0_i32_1 = arith.constant 0 : i32
    return %arg0, %c0_i32, %c0_i32_0 : i32, i32, i32
  }
  func.func @transform_12(%arg0: i32) -> (i32, i32, i32) {
    %c0_i32 = arith.constant 0 : i32
    %c0_i32_0 = arith.constant 0 : i32
    %c0_i32_1 = arith.constant 0 : i32
    return %arg0, %c0_i32, %c0_i32_0 : i32, i32, i32
  }
  func.func @transform_13(%arg0: i32) -> (i32, i32, i32) {
    %c0_i32 = arith.constant 0 : i32
    %c0_i32_0 = arith.constant 0 : i32
    %c0_i32_1 = arith.constant 0 : i32
    return %arg0, %c0_i32, %c0_i32_0 : i32, i32, i32
  }
}

</mosaic_0001>

<llo_original>
// kernel: tpu_custom_call.1
$region0: #{tpu_custom_call.1}
  #allocation0 [shape = 'u32[]', space=smem, size = 0x4, offset = 0x4, fixed_abs, tag = 'smem constant byte address 0x4 - core index']
  #allocation1 [shape = 'u32[72,128]{1,0:T(1,128)}', space=vmem, size = 0x9000, scoped, tag = 'internal scratch']
  %s0 = inlined_call_operand.hbm [shape: f32[2,16,16], index: 0, kind: input, shape index: {}]
  %s1 = inlined_call_operand.hbm [shape: f32[2,16,16], index: 1, kind: input, shape index: {}]
  %s2 = inlined_call_operand.vmem [shape: bf16[2,4,16,16], index: 2, kind: input, shape index: {}]
  %s3 = inlined_call_operand.vmem [shape: bf16[2,4,16,16], index: 3, kind: input, shape index: {}]
  %s4 = inlined_call_operand.vmem [shape: bf16[2,64,16], index: 4, kind: input, shape index: {}]
  %s5 = inlined_call_operand.vmem [shape: bf16[2,64,16], index: 5, kind: input, shape index: {}]
  %s6 = inlined_call_operand.vmem [shape: f32[16,16], index: 6, kind: input, shape index: {}]
  %s7 = inlined_call_operand.hbm [shape: bf16[16,16], index: 7, kind: input, shape index: {}]
  %s8 = inlined_call_operand.hbm [shape: bf16[16,16], index: 8, kind: input, shape index: {}]
  %s9 = inlined_call_operand.hbm [shape: bf16[16,16], index: 9, kind: input, shape index: {}]
  %s10 = inlined_call_operand.vmem [shape: bf16[16,16], index: 10, kind: input, shape index: {}]
  %s11 = inlined_call_operand.hbm [shape: f32[2,16,16], index: 11, kind: output, shape index: {0}]
  %s12 = inlined_call_operand.hbm [shape: f32[2,16,16], index: 12, kind: output, shape index: {1}]
  %s13 = inlined_call_operand.hbm [shape: f32[2,2,128], index: 13, kind: output, shape index: {2}]
  %14 = xla_tuple %s11, %s12, %s13
  %s15 = sld [smem:[#allocation0]]
  $region113: #{tpu_custom_call.1} parent=0
    _
  %s17 = ssub.s32 1, %s15
  %s18 = scalar_select 0, %s17, %s15
  $region1: #{tpu_custom_call.1} parent=0
    #allocation2 [shape = 'u8[16384]{0}', space=vmem, size = 0x4000, scoped, tag = 'input window, operand 0']
    #allocation3 [shape = 's32[2]{0}', space=sflag, size = 0x8, scoped, tag = 'scoped memory for tpu_custom_call.1']
    #allocation4 [shape = 's32[2]{0}', space=sflag, size = 0x8, scoped, tag = 'scoped memory for tpu_custom_call.1']
    #allocation5 [shape = 'u8[16384]{0}', space=vmem, size = 0x4000, scoped, tag = 'input window, operand 1']
    #allocation6 [shape = 's32[2]{0}', space=sflag, size = 0x8, scoped, tag = 'scoped memory for tpu_custom_call.1']
    #allocation7 [shape = 'u8[4096]{0}', space=vmem, size = 0x1000, scoped, tag = 'input window, operand 7, single buffered']
    #allocation8 [shape = 'u8[4096]{0}', space=vmem, size = 0x1000, scoped, tag = 'input window, operand 8, single buffered']
    #allocation9 [shape = 's32[1]{0}', space=sflag, size = 0x4, scoped, tag = 'scoped memory for tpu_custom_call.1']
    #allocation10 [shape = 'u8[4096]{0}', space=vmem, size = 0x1000, scoped, tag = 'input window, operand 9, single buffered']
    #allocation11 [shape = 'u8[16384]{0}', space=vmem, size = 0x4000, scoped, tag = 'output window, operand 0']
    #allocation12 [shape = 'u8[16384]{0}', space=vmem, size = 0x4000, scoped, tag = 'output window, operand 1']
    #allocation13 [shape = 's32[2]{0}', space=sflag, size = 0x8, scoped, tag = 'scoped memory for tpu_custom_call.1']
    #allocation14 [shape = 'u8[2048]{0}', space=vmem, size = 0x800, scoped, tag = 'output window, operand 2']
    %19 = vsyncpa [#allocation3], 0
    %s20 = scalar_lea.sflag [#allocation3], 1
    %21 = vsyncpa %s20, 0
    %22 = vsyncpa [#allocation6], 0
    %s23 = scalar_lea.sflag [#allocation6], 1
    %24 = vsyncpa %s23, 0
    %25 = vsyncpa [#allocation9], 0
    %26 = vsyncpa [#allocation4], 0
    %s27 = scalar_lea.sflag [#allocation4], 1
    %28 = vsyncpa %s27, 0
    %29 = vsyncpa [#allocation13], 0
    %s30 = scalar_lea.sflag [#allocation13], 1
    %31 = vsyncpa %s30, 0
    loop: start=0, step=1, limit=4
    $region2: #{tpu_custom_call.1} parent=1 // loop_pre_header
      _
    $region3: #{tpu_custom_call.1} parent=1 // loop_header
      %s33 = sphi 0, %s37
      %p34 = scmp.ge.s32.totalorder %s33, 4
      %s43 = sphi 0, %s45
      %s46 = sphi 0, %s43
      %s47 = sphi 0, %s46
      %s63 = sphi 0, %s47
      %s69 = sphi 0, %s71
      %s72 = sphi 0, %s69
      %s73 = sphi 0, %s72
      %s89 = sphi 0, %s73
      %s95 = sphi 0, %s97
      %s98 = sphi 0, %s95
      %s99 = sphi 0, %s98
      %s115 = sphi 0, %s99
      %s121 = sphi 0, %s123
      %s124 = sphi 0, %s121
      %s125 = sphi 0, %s124
      %s141 = sphi 0, %s125
      %s147 = sphi 0, %s149
      %s150 = sphi 0, %s147
      %s151 = sphi 0, %s150
      %s167 = sphi 0, %s151
      %s173 = sphi 0, %s175
      %s176 = sphi 0, %s173
      %s177 = sphi 0, %s176
      %s193 = sphi 0, %s177
      %s197 = sphi 0, %s197
      %s199 = sphi 0, %s197
      %s200 = sphi 0, %s199
      %s214 = sphi 0, %s200
      %s218 = sphi 0, %s218
      %s220 = sphi 0, %s218
      %s221 = sphi 0, %s220
      %s235 = sphi 0, %s221
      %s239 = sphi 0, %s239
      %s241 = sphi 0, %s239
      %s242 = sphi 0, %s241
      %s256 = sphi 0, %s242
      %s260 = sphi 0, %s260
      %s262 = sphi 0, %s260
      %s263 = sphi 0, %s262
      %s277 = sphi 0, %s263
      %s281 = sphi 0, %s281
      %s283 = sphi 0, %s281
      %s284 = sphi 0, %s283
      %s298 = sphi 0, %s284
      %s304 = sphi 0, %s306
      %s307 = sphi 0, %s304
      %s308 = sphi 0, %s307
      %s324 = sphi 0, %s308
      %s330 = sphi 0, %s332
      %s333 = sphi 0, %s330
      %s334 = sphi 0, %s333
      %s350 = sphi 0, %s334
      %s356 = sphi 0, %s358
      %s359 = sphi 0, %s356
      %s360 = sphi 0, %s359
      %s376 = sphi 0, %s360
    $region4: #{tpu_custom_call.1} parent=1 // loop_header_branch
      %36 = sbr.rel (%p34) target = $region8
    $region5: #{tpu_custom_call.1} parent=1 // loop_body
      %s38 = ssub.s32 %s33, 1
      %s39 = ssub.s32 %s33, 2
      %s40 = sadd.s32 %s33, 1
      %s41 = ssub.s32 %s33, %s40
      %p42 = scmp.eq.s32.totalorder %s41, 0
      %s44 = sadd.s32 %s43, 1
      %s45 = scalar_select %p42, %s43, %s44
      %p48 = pneg %p42
      %p49 = scmp.eq.s32.totalorder %s33, 1
      %p50 = por %p48, %p49
      %p51 = scmp.ne.s32.totalorder %s43, %s46
      %p52 = scmp.eq.s32.totalorder %s33, 0
      %p53 = por %p51, %p52
      %p54 = scmp.ne.s32.totalorder %s43, %s46
      %p55 = scmp.eq.s32.totalorder %s38, 1
      %p56 = por %p54, %p55
      %p57 = scmp.ne.s32.totalorder %s46, %s47
      %p58 = scmp.eq.s32.totalorder %s38, 0
      %p59 = por %p57, %p58
      %p60 = scmp.ne.s32.totalorder %s46, %s47
      %p61 = scmp.eq.s32.totalorder %s39, 1
      %p62 = por %p60, %p61
      %p64 = scmp.ne.s32.totalorder %s47, %s63
      %p65 = scmp.eq.s32.totalorder %s39, 0
      %p66 = por %p64, %p65
      %s67 = ssub.s32 %s33, %s40
      %p68 = scmp.eq.s32.totalorder %s67, 0
      %s70 = sadd.s32 %s69, 1
      %s71 = scalar_select %p68, %s69, %s70
      %p74 = pneg %p68
      %p75 = scmp.eq.s32.totalorder %s33, 1
      %p76 = por %p74, %p75
      %p77 = scmp.ne.s32.totalorder %s69, %s72
      %p78 = scmp.eq.s32.totalorder %s33, 0
      %p79 = por %p77, %p78
      %p80 = scmp.ne.s32.totalorder %s69, %s72
      %p81 = scmp.eq.s32.totalorder %s38, 1
      %p82 = por %p80, %p81
      %p83 = scmp.ne.s32.totalorder %s72, %s73
      %p84 = scmp.eq.s32.totalorder %s38, 0
      %p85 = por %p83, %p84
      %p86 = scmp.ne.s32.totalorder %s72, %s73
      %p87 = scmp.eq.s32.totalorder %s39, 1
      %p88 = por %p86, %p87
      %p90 = scmp.ne.s32.totalorder %s73, %s89
      %p91 = scmp.eq.s32.totalorder %s39, 0
      %p92 = por %p90, %p91
      %s93 = ssub.s32 %s33, %s40
      %p94 = scmp.eq.s32.totalorder %s93, 0
      %s96 = sadd.s32 %s95, 1
      %s97 = scalar_select %p94, %s95, %s96
      %p100 = pneg %p94
      %p101 = scmp.eq.s32.totalorder %s33, 1
      %p102 = por %p100, %p101
      %p103 = scmp.ne.s32.totalorder %s95, %s98
      %p104 = scmp.eq.s32.totalorder %s33, 0
      %p105 = por %p103, %p104
      %p106 = scmp.ne.s32.totalorder %s95, %s98
      %p107 = scmp.eq.s32.totalorder %s38, 1
      %p108 = por %p106, %p107
      %p109 = scmp.ne.s32.totalorder %s98, %s99
      %p110 = scmp.eq.s32.totalorder %s38, 0
      %p111 = por %p109, %p110
      %p112 = scmp.ne.s32.totalorder %s98, %s99
      %p113 = scmp.eq.s32.totalorder %s39, 1
      %p114 = por %p112, %p113
      %p116 = scmp.ne.s32.totalorder %s99, %s115
      %p117 = scmp.eq.s32.totalorder %s39, 0
      %p118 = por %p116, %p117
      %s119 = ssub.s32 %s33, %s40
      %p120 = scmp.eq.s32.totalorder %s119, 0
      %s122 = sadd.s32 %s121, 1
      %s123 = scalar_select %p120, %s121, %s122
      %p126 = pneg %p120
      %p127 = scmp.eq.s32.totalorder %s33, 1
      %p128 = por %p126, %p127
      %p129 = scmp.ne.s32.totalorder %s121, %s124
      %p130 = scmp.eq.s32.totalorder %s33, 0
      %p131 = por %p129, %p130
      %p132 = scmp.ne.s32.totalorder %s121, %s124
      %p133 = scmp.eq.s32.totalorder %s38, 1
      %p134 = por %p132, %p133
      %p135 = scmp.ne.s32.totalorder %s124, %s125
      %p136 = scmp.eq.s32.totalorder %s38, 0
      %p137 = por %p135, %p136
      %p138 = scmp.ne.s32.totalorder %s124, %s125
      %p139 = scmp.eq.s32.totalorder %s39, 1
      %p140 = por %p138, %p139
      %p142 = scmp.ne.s32.totalorder %s125, %s141
      %p143 = scmp.eq.s32.totalorder %s39, 0
      %p144 = por %p142, %p143
      %s145 = ssub.s32 %s33, %s40
      %p146 = scmp.eq.s32.totalorder %s145, 0
      %s148 = sadd.s32 %s147, 1
      %s149 = scalar_select %p146, %s147, %s148
      %p152 = pneg %p146
      %p153 = scmp.eq.s32.totalorder %s33, 1
      %p154 = por %p152, %p153
      %p155 = scmp.ne.s32.totalorder %s147, %s150
      %p156 = scmp.eq.s32.totalorder %s33, 0
      %p157 = por %p155, %p156
      %p158 = scmp.ne.s32.totalorder %s147, %s150
      %p159 = scmp.eq.s32.totalorder %s38, 1
      %p160 = por %p158, %p159
      %p161 = scmp.ne.s32.totalorder %s150, %s151
      %p162 = scmp.eq.s32.totalorder %s38, 0
      %p163 = por %p161, %p162
      %p164 = scmp.ne.s32.totalorder %s150, %s151
      %p165 = scmp.eq.s32.totalorder %s39, 1
      %p166 = por %p164, %p165
      %p168 = scmp.ne.s32.totalorder %s151, %s167
      %p169 = scmp.eq.s32.totalorder %s39, 0
      %p170 = por %p168, %p169
      %s171 = ssub.s32 %s33, %s40
      %p172 = scmp.eq.s32.totalorder %s171, 0
      %s174 = sadd.s32 %s173, 1
      %s175 = scalar_select %p172, %s173, %s174
      %p178 = pneg %p172
      %p179 = scmp.eq.s32.totalorder %s33, 1
      %p180 = por %p178, %p179
      %p181 = scmp.ne.s32.totalorder %s173, %s176
      %p182 = scmp.eq.s32.totalorder %s33, 0
      %p183 = por %p181, %p182
      %p184 = scmp.ne.s32.totalorder %s173, %s176
      %p185 = scmp.eq.s32.totalorder %s38, 1
      %p186 = por %p184, %p185
      %p187 = scmp.ne.s32.totalorder %s176, %s177
      %p188 = scmp.eq.s32.totalorder %s38, 0
      %p189 = por %p187, %p188
      %p190 = scmp.ne.s32.totalorder %s176, %s177
      %p191 = scmp.eq.s32.totalorder %s39, 1
      %p192 = por %p190, %p191
      %p194 = scmp.ne.s32.totalorder %s177, %s193
      %p195 = scmp.eq.s32.totalorder %s39, 0
      %p196 = por %p194, %p195
      %s198 = sadd.s32 %s197, 1
      %p201 = scmp.eq.s32.totalorder %s33, 1
      %p202 = scmp.ne.s32.totalorder %s197, %s199
      %p203 = scmp.eq.s32.totalorder %s33, 0
      %p204 = por %p202, %p203
      %p205 = scmp.ne.s32.totalorder %s197, %s199
      %p206 = scmp.eq.s32.totalorder %s38, 1
      %p207 = por %p205, %p206
      %p208 = scmp.ne.s32.totalorder %s199, %s200
      %p209 = scmp.eq.s32.totalorder %s38, 0
      %p210 = por %p208, %p209
      %p211 = scmp.ne.s32.totalorder %s199, %s200
      %p212 = scmp.eq.s32.totalorder %s39, 1
      %p213 = por %p211, %p212
      %p215 = scmp.ne.s32.totalorder %s200, %s214
      %p216 = scmp.eq.s32.totalorder %s39, 0
      %p217 = por %p215, %p216
      %s219 = sadd.s32 %s218, 1
      %p222 = scmp.eq.s32.totalorder %s33, 1
      %p223 = scmp.ne.s32.totalorder %s218, %s220
      %p224 = scmp.eq.s32.totalorder %s33, 0
      %p225 = por %p223, %p224
      %p226 = scmp.ne.s32.totalorder %s218, %s220
      %p227 = scmp.eq.s32.totalorder %s38, 1
      %p228 = por %p226, %p227
      %p229 = scmp.ne.s32.totalorder %s220, %s221
      %p230 = scmp.eq.s32.totalorder %s38, 0
      %p231 = por %p229, %p230
      %p232 = scmp.ne.s32.totalorder %s220, %s221
      %p233 = scmp.eq.s32.totalorder %s39, 1
      %p234 = por %p232, %p233
      %p236 = scmp.ne.s32.totalorder %s221, %s235
      %p237 = scmp.eq.s32.totalorder %s39, 0
      %p238 = por %p236, %p237
      %s240 = sadd.s32 %s239, 1
      %p243 = scmp.eq.s32.totalorder %s33, 1
      %p244 = scmp.ne.s32.totalorder %s239, %s241
      %p245 = scmp.eq.s32.totalorder %s33, 0
      %p246 = por %p244, %p245
      %p247 = scmp.ne.s32.totalorder %s239, %s241
      %p248 = scmp.eq.s32.totalorder %s38, 1
      %p249 = por %p247, %p248
      %p250 = scmp.ne.s32.totalorder %s241, %s242
      %p251 = scmp.eq.s32.totalorder %s38, 0
      %p252 = por %p250, %p251
      %p253 = scmp.ne.s32.totalorder %s241, %s242
      %p254 = scmp.eq.s32.totalorder %s39, 1
      %p255 = por %p253, %p254
      %p257 = scmp.ne.s32.totalorder %s242, %s256
      %p258 = scmp.eq.s32.totalorder %s39, 0
      %p259 = por %p257, %p258
      %s261 = sadd.s32 %s260, 1
      %p264 = scmp.eq.s32.totalorder %s33, 1
      %p265 = scmp.ne.s32.totalorder %s260, %s262
      %p266 = scmp.eq.s32.totalorder %s33, 0
      %p267 = por %p265, %p266
      %p268 = scmp.ne.s32.totalorder %s260, %s262
      %p269 = scmp.eq.s32.totalorder %s38, 1
      %p270 = por %p268, %p269
      %p271 = scmp.ne.s32.totalorder %s262, %s263
      %p272 = scmp.eq.s32.totalorder %s38, 0
      %p273 = por %p271, %p272
      %p274 = scmp.ne.s32.totalorder %s262, %s263
      %p275 = scmp.eq.s32.totalorder %s39, 1
      %p276 = por %p274, %p275
      %p278 = scmp.ne.s32.totalorder %s263, %s277
      %p279 = scmp.eq.s32.totalorder %s39, 0
      %p280 = por %p278, %p279
      %s282 = sadd.s32 %s281, 1
      %p285 = scmp.eq.s32.totalorder %s33, 1
      %p286 = scmp.ne.s32.totalorder %s281, %s283
      %p287 = scmp.eq.s32.totalorder %s33, 0
      %p288 = por %p286, %p287
      %p289 = scmp.ne.s32.totalorder %s281, %s283
      %p290 = scmp.eq.s32.totalorder %s38, 1
      %p291 = por %p289, %p290
      %p292 = scmp.ne.s32.totalorder %s283, %s284
      %p293 = scmp.eq.s32.totalorder %s38, 0
      %p294 = por %p292, %p293
      %p295 = scmp.ne.s32.totalorder %s283, %s284
      %p296 = scmp.eq.s32.totalorder %s39, 1
      %p297 = por %p295, %p296
      %p299 = scmp.ne.s32.totalorder %s284, %s298
      %p300 = scmp.eq.s32.totalorder %s39, 0
      %p301 = por %p299, %p300
      %s302 = ssub.s32 %s33, %s40
      %p303 = scmp.eq.s32.totalorder %s302, 0
      %s305 = sadd.s32 %s304, 1
      %s306 = scalar_select %p303, %s304, %s305
      %p309 = pneg %p303
      %p310 = scmp.eq.s32.totalorder %s33, 1
      %p311 = por %p309, %p310
      %p312 = scmp.ne.s32.totalorder %s304, %s307
      %p313 = scmp.eq.s32.totalorder %s33, 0
      %p314 = por %p312, %p313
      %p315 = scmp.ne.s32.totalorder %s304, %s307
      %p316 = scmp.eq.s32.totalorder %s38, 1
      %p317 = por %p315, %p316
      %p318 = scmp.ne.s32.totalorder %s307, %s308
      %p319 = scmp.eq.s32.totalorder %s38, 0
      %p320 = por %p318, %p319
      %p321 = scmp.ne.s32.totalorder %s307, %s308
      %p322 = scmp.eq.s32.totalorder %s39, 1
      %p323 = por %p321, %p322
      %p325 = scmp.ne.s32.totalorder %s308, %s324
      %p326 = scmp.eq.s32.totalorder %s39, 0
      %p327 = por %p325, %p326
      %s328 = ssub.s32 %s33, %s40
      %p329 = scmp.eq.s32.totalorder %s328, 0
      %s331 = sadd.s32 %s330, 1
      %s332 = scalar_select %p329, %s330, %s331
      %p335 = pneg %p329
      %p336 = scmp.eq.s32.totalorder %s33, 1
      %p337 = por %p335, %p336
      %p338 = scmp.ne.s32.totalorder %s330, %s333
      %p339 = scmp.eq.s32.totalorder %s33, 0
      %p340 = por %p338, %p339
      %p341 = scmp.ne.s32.totalorder %s330, %s333
      %p342 = scmp.eq.s32.totalorder %s38, 1
      %p343 = por %p341, %p342
      %p344 = scmp.ne.s32.totalorder %s333, %s334
      %p345 = scmp.eq.s32.totalorder %s38, 0
      %p346 = por %p344, %p345
      %p347 = scmp.ne.s32.totalorder %s333, %s334
      %p348 = scmp.eq.s32.totalorder %s39, 1
      %p349 = por %p347, %p348
      %p351 = scmp.ne.s32.totalorder %s334, %s350
      %p352 = scmp.eq.s32.totalorder %s39, 0
      %p353 = por %p351, %p352
      %s354 = ssub.s32 %s33, %s40
      %p355 = scmp.eq.s32.totalorder %s354, 0
      %s357 = sadd.s32 %s356, 1
      %s358 = scalar_select %p355, %s356, %s357
      %p361 = pneg %p355
      %p362 = scmp.eq.s32.totalorder %s33, 1
      %p363 = por %p361, %p362
      %p364 = scmp.ne.s32.totalorder %s356, %s359
      %p365 = scmp.eq.s32.totalorder %s33, 0
      %p366 = por %p364, %p365
      %p367 = scmp.ne.s32.totalorder %s356, %s359
      %p368 = scmp.eq.s32.totalorder %s38, 1
      %p369 = por %p367, %p368
      %p370 = scmp.ne.s32.totalorder %s359, %s360
      %p371 = scmp.eq.s32.totalorder %s38, 0
      %p372 = por %p370, %p371
      %p373 = scmp.ne.s32.totalorder %s359, %s360
      %p374 = scmp.eq.s32.totalorder %s39, 1
      %p375 = por %p373, %p374
      %p377 = scmp.ne.s32.totalorder %s360, %s376
      %p378 = scmp.eq.s32.totalorder %s39, 0
      %p379 = por %p377, %p378
      %p380 = scmp.le.s32.totalorder 1, %s33
      %p381 = scmp.lt.s32.totalorder %s33, 3
      %p382 = pnand %p380, %p381
      %p383 = pneg %p382
      // Predicated region
      $region9: #{tpu_custom_call.1} parent=5 // pred_check
        _
      $region10: #{tpu_custom_call.1} parent=5 // pred_check_branch
        %385 = sbr.rel (%p382) target = $region12
      $region11: #{tpu_custom_call.1} parent=5 // pred_region
        %s386 = ssub.s32 %s33, 1
        // Predicated region
        $region13: #{tpu_custom_call.1} parent=11 // pred_check
          %p387 = pneg %p210
        $region14: #{tpu_custom_call.1} parent=11 // pred_check_branch
          %389 = sbr.rel (%p387) target = $region16
        $region15: #{tpu_custom_call.1} parent=11 // pred_region
          _
        $region16: #{tpu_custom_call.1} parent=11 // pred_fallthru
          _
        // Predicated region
        $region17: #{tpu_custom_call.1} parent=11 // pred_check
          %p390 = pneg %p231
        $region18: #{tpu_custom_call.1} parent=11 // pred_check_branch
          %392 = sbr.rel (%p390) target = $region20
        $region19: #{tpu_custom_call.1} parent=11 // pred_region
          %394 = vsyncadd [#allocation6], 0
          %s395 = sshll.u32 %s7, 4
          %s396 = int_to_ptr.hbm [resolvable:$true] %s395
          %s397 = sshll.u32 [#allocation7], 4
          %s398 = int_to_ptr.vmem [resolvable:$true] %s397
          %403 = dma.hbm_to_vmem [thread:$0]  %s396, 128, %s398, [#allocation6], 64, 64, 4
        $region20: #{tpu_custom_call.1} parent=11 // pred_fallthru
          _
        // Predicated region
        $region21: #{tpu_custom_call.1} parent=11 // pred_check
          %p404 = pneg %p252
        $region22: #{tpu_custom_call.1} parent=11 // pred_check_branch
          %406 = sbr.rel (%p404) target = $region24
        $region23: #{tpu_custom_call.1} parent=11 // pred_region
          %408 = vsyncadd [#allocation9], 0
          %s409 = sshll.u32 %s8, 4
          %s410 = int_to_ptr.hbm [resolvable:$true] %s409
          %s411 = sshll.u32 [#allocation8], 4
          %s412 = int_to_ptr.vmem [resolvable:$true] %s411
          %417 = dma.hbm_to_vmem [thread:$0]  %s410, 128, %s412, [#allocation9], 64, 64, 4
        $region24: #{tpu_custom_call.1} parent=11 // pred_fallthru
          _
        // Predicated region
        $region25: #{tpu_custom_call.1} parent=11 // pred_check
          %p418 = pneg %p273
        $region26: #{tpu_custom_call.1} parent=11 // pred_check_branch
          %420 = sbr.rel (%p418) target = $region28
        $region27: #{tpu_custom_call.1} parent=11 // pred_region
          %422 = vsyncadd [#allocation9], 0
          %s423 = sshll.u32 %s9, 4
          %s424 = int_to_ptr.hbm [resolvable:$true] %s423
          %s425 = sshll.u32 [#allocation10], 4
          %s426 = int_to_ptr.vmem [resolvable:$true] %s425
          %431 = dma.hbm_to_vmem [thread:$0]  %s424, 128, %s426, [#allocation9], 64, 64, 4
        $region28: #{tpu_custom_call.1} parent=11 // pred_fallthru
          _
        // Predicated region
        $region29: #{tpu_custom_call.1} parent=11 // pred_check
          %p432 = pneg %p294
        $region30: #{tpu_custom_call.1} parent=11 // pred_check_branch
          %434 = sbr.rel (%p432) target = $region32
        $region31: #{tpu_custom_call.1} parent=11 // pred_region
          _
        $region32: #{tpu_custom_call.1} parent=11 // pred_fallthru
          _
      $region12: #{tpu_custom_call.1} parent=5 // pred_fallthru
        _
      %p435 = scmp.lt.s32.totalorder %s33, 2
      // Predicated region
      $region33: #{tpu_custom_call.1} parent=5 // pred_check
        %p436 = pneg %p435
      $region34: #{tpu_custom_call.1} parent=5 // pred_check_branch
        %438 = sbr.rel (%p436) target = $region36
      $region35: #{tpu_custom_call.1} parent=5 // pred_region
        // Predicated region
        $region37: #{tpu_custom_call.1} parent=35 // pred_check
          %p439 = pneg %p53
        $region38: #{tpu_custom_call.1} parent=35 // pred_check_branch
          %441 = sbr.rel (%p439) target = $region40
        $region39: #{tpu_custom_call.1} parent=35 // pred_region
          %s442 = sand.u32 %s43, 1
          %s443 = scalar_lea.sflag [#allocation3], %s442
          %s444 = sand.u32 %s43, 1
          %s445 = smul.addr %s444, 16
          %s446 = scalar_lea.vmem [#allocation2], %s445
          %448 = vsyncadd %s443, 0
          %s449 = smul.addr %s33, 2
          %s450 = smul.addr %s449, 8
          %s451 = scalar_lea.hbm %s0, %s450
          %s452 = sshll.u32 %s451, 4
          %s453 = int_to_ptr.hbm [resolvable:$true] %s452
          %s454 = sshll.u32 %s446, 4
          %s455 = int_to_ptr.vmem [resolvable:$true] %s454
          %460 = dma.hbm_to_vmem [thread:$0]  %s453, 256, %s455, %s443, 128, 128, 8
        $region40: #{tpu_custom_call.1} parent=35 // pred_fallthru
          _
        // Predicated region
        $region41: #{tpu_custom_call.1} parent=35 // pred_check
          %p461 = pneg %p79
        $region42: #{tpu_custom_call.1} parent=35 // pred_check_branch
          %463 = sbr.rel (%p461) target = $region44
        $region43: #{tpu_custom_call.1} parent=35 // pred_region
          %s464 = sand.u32 %s33, 1
          %s465 = scalar_lea.sflag [#allocation6], %s464
          %s466 = sand.u32 %s69, 1
          %s467 = smul.addr %s466, 16
          %s468 = scalar_lea.vmem [#allocation5], %s467
          %470 = vsyncadd %s465, 0
          %s471 = smul.addr %s33, 2
          %s472 = smul.addr %s471, 8
          %s473 = scalar_lea.hbm %s1, %s472
          %s474 = sshll.u32 %s473, 4
          %s475 = int_to_ptr.hbm [resolvable:$true] %s474
          %s476 = sshll.u32 %s468, 4
          %s477 = int_to_ptr.vmem [resolvable:$true] %s476
          %482 = dma.hbm_to_vmem [thread:$0]  %s475, 256, %s477, %s465, 128, 128, 8
        $region44: #{tpu_custom_call.1} parent=35 // pred_fallthru
          _
        // Predicated region
        $region45: #{tpu_custom_call.1} parent=35 // pred_check
          %p483 = pneg %p105
        $region46: #{tpu_custom_call.1} parent=35 // pred_check_branch
          %485 = sbr.rel (%p483) target = $region48
        $region47: #{tpu_custom_call.1} parent=35 // pred_region
          %p486 = scmp.lt.s32.totalorder %s33, 1
          %s487 = scalar_select %p486, %s33, 1
          %s488 = smul.addr %s487, 8
          %s489 = smul.addr %s488, 4
          %s490 = scalar_lea.vmem %s2, %s489
        $region48: #{tpu_custom_call.1} parent=35 // pred_fallthru
          _
        // Predicated region
        $region49: #{tpu_custom_call.1} parent=35 // pred_check
          %p491 = pneg %p131
        $region50: #{tpu_custom_call.1} parent=35 // pred_check_branch
          %493 = sbr.rel (%p491) target = $region52
        $region51: #{tpu_custom_call.1} parent=35 // pred_region
          %p494 = scmp.lt.s32.totalorder %s33, 1
          %s495 = scalar_select %p494, %s33, 1
          %s496 = smul.addr %s495, 8
          %s497 = smul.addr %s496, 4
          %s498 = scalar_lea.vmem %s3, %s497
        $region52: #{tpu_custom_call.1} parent=35 // pred_fallthru
          _
        // Predicated region
        $region53: #{tpu_custom_call.1} parent=35 // pred_check
          %p499 = pneg %p157
        $region54: #{tpu_custom_call.1} parent=35 // pred_check_branch
          %501 = sbr.rel (%p499) target = $region56
        $region55: #{tpu_custom_call.1} parent=35 // pred_region
          %p502 = scmp.lt.s32.totalorder %s33, 1
          %s503 = scalar_select %p502, %s33, 1
          %s504 = smul.addr %s503, 8
          %s505 = smul.addr %s504, 4
          %s506 = scalar_lea.vmem %s4, %s505
        $region56: #{tpu_custom_call.1} parent=35 // pred_fallthru
          _
        // Predicated region
        $region57: #{tpu_custom_call.1} parent=35 // pred_check
          %p507 = pneg %p183
        $region58: #{tpu_custom_call.1} parent=35 // pred_check_branch
          %509 = sbr.rel (%p507) target = $region60
        $region59: #{tpu_custom_call.1} parent=35 // pred_region
          %p510 = scmp.lt.s32.totalorder %s33, 1
          %s511 = scalar_select %p510, %s33, 1
          %s512 = smul.addr %s511, 8
          %s513 = smul.addr %s512, 4
          %s514 = scalar_lea.vmem %s5, %s513
        $region60: #{tpu_custom_call.1} parent=35 // pred_fallthru
          _
      $region36: #{tpu_custom_call.1} parent=5 // pred_fallthru
        _
      %p515 = scmp.le.s32.totalorder 1, %s33
      %p516 = scmp.lt.s32.totalorder %s33, 3
      %p517 = pnand %p515, %p516
      %p518 = pneg %p517
      // Predicated region
      $region61: #{tpu_custom_call.1} parent=5 // pred_check
        _
      $region62: #{tpu_custom_call.1} parent=5 // pred_check_branch
        %520 = sbr.rel (%p517) target = $region64
      $region63: #{tpu_custom_call.1} parent=5 // pred_region
        %s521 = ssub.s32 %s33, 1
        %s522 = sand.u32 %s46, 1
        %s523 = scalar_lea.sflag [#allocation3], %s522
        %s524 = sand.u32 %s46, 1
        %s525 = smul.addr %s524, 16
        %s526 = scalar_lea.vmem [#allocation2], %s525
        // Predicated region
        $region65: #{tpu_custom_call.1} parent=63 // pred_check
          %p527 = pneg %p59
        $region66: #{tpu_custom_call.1} parent=63 // pred_check_branch
          %529 = sbr.rel (%p527) target = $region68
        $region67: #{tpu_custom_call.1} parent=63 // pred_region
          %531 = dma.done %s523, 256
        $region68: #{tpu_custom_call.1} parent=63 // pred_fallthru
          _
        %s532 = sand.u32 %s38, 1
        %s533 = scalar_lea.sflag [#allocation6], %s532
        %s534 = sand.u32 %s72, 1
        %s535 = smul.addr %s534, 16
        %s536 = scalar_lea.vmem [#allocation5], %s535
        // Predicated region
        $region69: #{tpu_custom_call.1} parent=63 // pred_check
          %p537 = pneg %p85
        $region70: #{tpu_custom_call.1} parent=63 // pred_check_branch
          %539 = sbr.rel (%p537) target = $region72
        $region71: #{tpu_custom_call.1} parent=63 // pred_region
          %541 = dma.done %s533, 256
        $region72: #{tpu_custom_call.1} parent=63 // pred_fallthru
          _
        // Predicated region
        $region73: #{tpu_custom_call.1} parent=63 // pred_check
          %p542 = pneg %p231
        $region74: #{tpu_custom_call.1} parent=63 // pred_check_branch
          %544 = sbr.rel (%p542) target = $region76
        $region75: #{tpu_custom_call.1} parent=63 // pred_region
          %546 = dma.done [#allocation6], 128
        $region76: #{tpu_custom_call.1} parent=63 // pred_fallthru
          _
        // Predicated region
        $region77: #{tpu_custom_call.1} parent=63 // pred_check
          %p547 = pneg %p252
        $region78: #{tpu_custom_call.1} parent=63 // pred_check_branch
          %549 = sbr.rel (%p547) target = $region80
        $region79: #{tpu_custom_call.1} parent=63 // pred_region
          %551 = dma.done [#allocation9], 128
        $region80: #{tpu_custom_call.1} parent=63 // pred_fallthru
          _
        // Predicated region
        $region81: #{tpu_custom_call.1} parent=63 // pred_check
          %p552 = pneg %p273
        $region82: #{tpu_custom_call.1} parent=63 // pred_check_branch
          %554 = sbr.rel (%p552) target = $region84
        $region83: #{tpu_custom_call.1} parent=63 // pred_region
          %556 = dma.done [#allocation9], 128
        $region84: #{tpu_custom_call.1} parent=63 // pred_fallthru
          _
        %s557 = sand.u32 %s46, 1
        %s558 = scalar_lea.sflag [#allocation3], %s557
        %s559 = sand.u32 %s46, 1
        %s560 = smul.addr %s559, 16
        %s561 = scalar_lea.vmem [#allocation2], %s560
        %p562 = pneg %p59
        %p563 = pneg %p56
        %s564 = sand.u32 %s38, 1
        %s565 = scalar_lea.sflag [#allocation6], %s564
        %s566 = sand.u32 %s72, 1
        %s567 = smul.addr %s566, 16
        %s568 = scalar_lea.vmem [#allocation5], %s567
        %p569 = pneg %p85
        %p570 = pneg %p82
        %p571 = scmp.lt.s32.totalorder %s38, 1
        %s572 = scalar_select %p571, %s38, 1
        %s573 = smul.addr %s572, 8
        %s574 = smul.addr %s573, 4
        %s575 = scalar_lea.vmem %s2, %s574
        %p576 = pneg %p111
        %p577 = pneg %p108
        %p578 = scmp.lt.s32.totalorder %s38, 1
        %s579 = scalar_select %p578, %s38, 1
        %s580 = smul.addr %s579, 8
        %s581 = smul.addr %s580, 4
        %s582 = scalar_lea.vmem %s3, %s581
        %p583 = pneg %p137
        %p584 = pneg %p134
        %p585 = scmp.lt.s32.totalorder %s38, 1
        %s586 = scalar_select %p585, %s38, 1
        %s587 = smul.addr %s586, 8
        %s588 = smul.addr %s587, 4
        %s589 = scalar_lea.vmem %s4, %s588
        %p590 = pneg %p163
        %p591 = pneg %p160
        %p592 = scmp.lt.s32.totalorder %s38, 1
        %s593 = scalar_select %p592, %s38, 1
        %s594 = smul.addr %s593, 8
        %s595 = smul.addr %s594, 4
        %s596 = scalar_lea.vmem %s5, %s595
        %p597 = pneg %p189
        %p598 = pneg %p186
        %p599 = pneg %p210
        %p600 = pneg %p207
        %p601 = pneg %p231
        %p602 = pneg %p228
        %p603 = pneg %p252
        %p604 = pneg %p249
        %p605 = pneg %p273
        %p606 = pneg %p270
        %p607 = pneg %p294
        %p608 = pneg %p291
        %p609 = pneg %p320
        %p610 = pneg %p317
        %s611 = sand.u32 %s307, 1
        %s612 = scalar_lea.sflag [#allocation4], %s611
        %s613 = sand.u32 %s307, 1
        %s614 = smul.addr %s613, 16
        %s615 = scalar_lea.vmem [#allocation11], %s614
        %p616 = pneg %p346
        %p617 = pneg %p343
        %s618 = sand.u32 %s38, 1
        %s619 = scalar_lea.sflag [#allocation13], %s618
        %s620 = sand.u32 %s333, 1
        %s621 = smul.addr %s620, 16
        %s622 = scalar_lea.vmem [#allocation12], %s621
        %p623 = pneg %p372
        %p624 = pneg %p369
        %s625 = sand.u32 %s38, 1
        %s626 = scalar_lea.sflag [#allocation13], %s625
        %s627 = sand.u32 %s359, 1
        %s628 = smul.addr %s627, 2
        %s629 = scalar_lea.vmem [#allocation14], %s628
        %p630 = scmp.lt.s32.totalorder %s38, 1
        %s631 = scalar_select %p630, %s38, 1
        %s632 = smul.addr %s631, 8
        %s633 = smul.addr %s632, 4
        %s634 = scalar_lea.vmem %s2, %s633
        %p635 = scmp.lt.s32.totalorder %s38, 1
        %s636 = scalar_select %p635, %s38, 1
        %s637 = smul.addr %s636, 8
        %s638 = smul.addr %s637, 4
        %s639 = scalar_lea.vmem %s3, %s638
        %p640 = scmp.lt.s32.totalorder %s38, 1
        %s641 = scalar_select %p640, %s38, 1
        %s642 = smul.addr %s641, 8
        %s643 = smul.addr %s642, 4
        %s644 = scalar_lea.vmem %s4, %s643
        %p645 = scmp.lt.s32.totalorder %s38, 1
        %s646 = scalar_select %p645, %s38, 1
        %s647 = smul.addr %s646, 8
        %s648 = smul.addr %s647, 4
        %s649 = scalar_lea.vmem %s5, %s648
        %v651 = vld [vmem:[%s526] sm:$0xff]
        %v652 = vld [vmem:[%s526 + $0x8] sm:$0xff]
        %v653 = vld [vmem:[%s536] sm:$0xff]
        %v654 = vld [vmem:[%s536 + $0x8] sm:$0xff]
        %v655 = vld [vmem:[%s634] sm:$0xf]
        %v656 = vld [vmem:[%s634 + $0x4] sm:$0xf]
        %v657 = vld [vmem:[%s634 + $0x8] sm:$0xf]
        %v658 = vld [vmem:[%s634 + $0xc] sm:$0xf]
        %v659 = vld [vmem:[%s634 + $0x10] sm:$0xf]
        %v660 = vld [vmem:[%s634 + $0x14] sm:$0xf]
        %v661 = vld [vmem:[%s634 + $0x18] sm:$0xf]
        %v662 = vld [vmem:[%s634 + $0x1c] sm:$0xf]
        %v663 = vld [vmem:[%s639] sm:$0xf]
        %v664 = vld [vmem:[%s639 + $0x4] sm:$0xf]
        %v665 = vld [vmem:[%s639 + $0x8] sm:$0xf]
        %v666 = vld [vmem:[%s639 + $0xc] sm:$0xf]
        %v667 = vld [vmem:[%s639 + $0x10] sm:$0xf]
        %v668 = vld [vmem:[%s639 + $0x14] sm:$0xf]
        %v669 = vld [vmem:[%s639 + $0x18] sm:$0xf]
        %v670 = vld [vmem:[%s639 + $0x1c] sm:$0xf]
        %v671 = vld [vmem:[%s644] sm:$0xf]
        %v672 = vld [vmem:[%s644 + $0x4] sm:$0xf]
        %v673 = vld [vmem:[%s644 + $0x8] sm:$0xf]
        %v674 = vld [vmem:[%s644 + $0xc] sm:$0xf]
        %v675 = vld [vmem:[%s644 + $0x10] sm:$0xf]
        %v676 = vld [vmem:[%s644 + $0x14] sm:$0xf]
        %v677 = vld [vmem:[%s644 + $0x18] sm:$0xf]
        %v678 = vld [vmem:[%s644 + $0x1c] sm:$0xf]
        %v679 = vld [vmem:[%s649] sm:$0xf]
        %v680 = vld [vmem:[%s649 + $0x4] sm:$0xf]
        %v681 = vld [vmem:[%s649 + $0x8] sm:$0xf]
        %v682 = vld [vmem:[%s649 + $0xc] sm:$0xf]
        %v683 = vld [vmem:[%s649 + $0x10] sm:$0xf]
        %v684 = vld [vmem:[%s649 + $0x14] sm:$0xf]
        %v685 = vld [vmem:[%s649 + $0x18] sm:$0xf]
        %v686 = vld [vmem:[%s649 + $0x1c] sm:$0xf]
        %v687 = vld [vmem:[%s6] sm:$0xff]
        %v688 = vld [vmem:[%s6 + $0x8] sm:$0xff]
        %v689 = vld [vmem:[#allocation7] sm:$0xf]
        %v690 = vld [vmem:[#allocation7 + $0x4] sm:$0xf]
        %v691 = vld [vmem:[#allocation8] sm:$0xf]
        %v692 = vld [vmem:[#allocation8 + $0x4] sm:$0xf]
        %v693 = vld [vmem:[#allocation10] sm:$0xf]
        %v694 = vld [vmem:[#allocation10 + $0x4] sm:$0xf]
        %v695 = vld [vmem:[%s10] sm:$0xf]
        %v696 = vld [vmem:[%s10 + $0x4] sm:$0xf]
        %v697 = vunpack.c.l.bf16 %v655
        %v698 = vunpack.c.l.bf16 %v656
        %v699 = vunpack.c.l.bf16 %v657
        %v700 = vunpack.c.l.bf16 %v658
        %v701 = vunpack.c.l.bf16 %v659
        %v702 = vunpack.c.l.bf16 %v660
        %v703 = vunpack.c.l.bf16 %v661
        %v704 = vunpack.c.l.bf16 %v662
        %v705 = vmul.f32 %v651, %v697
        %v706 = vmul.f32 %v652, %v698
        %v707 = vmul.f32 %v651, %v699
        %v708 = vmul.f32 %v652, %v700
        %v709 = vmul.f32 %v651, %v701
        %v710 = vmul.f32 %v652, %v702
        %v711 = vmul.f32 %v651, %v703
        %v712 = vmul.f32 %v652, %v704
        %v713 = vunpack.c.l.bf16 %v663
        %v714 = vunpack.c.l.bf16 %v664
        %v715 = vunpack.c.l.bf16 %v665
        %v716 = vunpack.c.l.bf16 %v666
        %v717 = vunpack.c.l.bf16 %v667
        %v718 = vunpack.c.l.bf16 %v668
        %v719 = vunpack.c.l.bf16 %v669
        %v720 = vunpack.c.l.bf16 %v670
        %v721 = vmul.f32 %v653, %v713
        %v722 = vmul.f32 %v654, %v714
        %v723 = vmul.f32 %v653, %v715
        %v724 = vmul.f32 %v654, %v716
        %v725 = vmul.f32 %v653, %v717
        %v726 = vmul.f32 %v654, %v718
        %v727 = vmul.f32 %v653, %v719
        %v728 = vmul.f32 %v654, %v720
        %v729 = vsub.f32 %v705, %v721
        %v730 = vsub.f32 %v706, %v722
        %v731 = vsub.f32 %v707, %v723
        %v732 = vsub.f32 %v708, %v724
        %v733 = vsub.f32 %v709, %v725
        %v734 = vsub.f32 %v710, %v726
        %v735 = vsub.f32 %v711, %v727
        %v736 = vsub.f32 %v712, %v728
        %v737 = vpack.c.bf16 %v729, %v729
        %v738 = vpack.c.bf16 %v730, %v730
        %v739 = vpack.c.bf16 %v731, %v731
        %v740 = vpack.c.bf16 %v732, %v732
        %v741 = vpack.c.bf16 %v733, %v733
        %v742 = vpack.c.bf16 %v734, %v734
        %v743 = vpack.c.bf16 %v735, %v735
        %v744 = vpack.c.bf16 %v736, %v736
        %v745 = vmul.f32 %v651, %v713
        %v746 = vmul.f32 %v652, %v714
        %v747 = vmul.f32 %v651, %v715
        %v748 = vmul.f32 %v652, %v716
        %v749 = vmul.f32 %v651, %v717
        %v750 = vmul.f32 %v652, %v718
        %v751 = vmul.f32 %v651, %v719
        %v752 = vmul.f32 %v652, %v720
        %v753 = vmul.f32 %v653, %v697
        %v754 = vmul.f32 %v654, %v698
        %v755 = vmul.f32 %v653, %v699
        %v756 = vmul.f32 %v654, %v700
        %v757 = vmul.f32 %v653, %v701
        %v758 = vmul.f32 %v654, %v702
        %v759 = vmul.f32 %v653, %v703
        %v760 = vmul.f32 %v654, %v704
        %v761 = vadd.f32 %v745, %v753
        %v762 = vadd.f32 %v746, %v754
        %v763 = vadd.f32 %v747, %v755
        %v764 = vadd.f32 %v748, %v756
        %v765 = vadd.f32 %v749, %v757
        %v766 = vadd.f32 %v750, %v758
        %v767 = vadd.f32 %v751, %v759
        %v768 = vadd.f32 %v752, %v760
        %v769 = vpack.c.bf16 %v761, %v761
        %v770 = vpack.c.bf16 %v762, %v762
        %v771 = vpack.c.bf16 %v763, %v763
        %v772 = vpack.c.bf16 %v764, %v764
        %v773 = vpack.c.bf16 %v765, %v765
        %v774 = vpack.c.bf16 %v766, %v766
        %v775 = vpack.c.bf16 %v767, %v767
        %v776 = vpack.c.bf16 %v768, %v768
        %v779 = vunpack.c.l.b16 %v689
        %v780 = vunpack.c.l.b16 %v690
        %v781 = vpack.c.b16 %v780, %v779
        %v784 = vunpack.c.l.b16 %v737
        %v785 = vunpack.c.l.b16 %v738
        %v786 = vpack.c.b16 %v785, %v784
        %vm788 = vcmask 130048
        %v790 = vsel %vm788, %v781, 0
        %792 = vmatpush.bf16.msra.mxu0 0
        %793 = vmatpush.bf16.msra.mxu0 0
        %794 = vmatpush.bf16.msra.mxu0 0
        %795 = vmatpush.bf16.msra.mxu0 0
        %796 = vmatpush.bf16.msra.mxu0 0
        %797 = vmatpush.bf16.msra.mxu0 0
        %798 = vmatpush.bf16.msra.mxu0 0
        %799 = vmatpush.bf16.msra.mxu0 %v786
        %800 = vmatmul.bf16.gmra.mxu0 %v790
        %v801 = vpop.f32.mrf.mxu0
        %v802 = vadd.f32 0.0, %v801
        %v803 = vpop.f32.mrf.mxu0
        %v804 = vadd.f32 0.0, %v803
        %805 = vdwg.mxu0
        %v808 = vunpack.c.l.b16 %v739
        %v809 = vunpack.c.l.b16 %v740
        %v810 = vpack.c.b16 %v809, %v808
        %812 = vmatpush.bf16.msra.mxu0 0
        %813 = vmatpush.bf16.msra.mxu0 0
        %814 = vmatpush.bf16.msra.mxu0 0
        %815 = vmatpush.bf16.msra.mxu0 0
        %816 = vmatpush.bf16.msra.mxu0 0
        %817 = vmatpush.bf16.msra.mxu0 0
        %818 = vmatpush.bf16.msra.mxu0 0
        %819 = vmatpush.bf16.msra.mxu0 %v810
        %820 = vmatmul.bf16.gmra.mxu0 %v790
        %v821 = vpop.f32.mrf.mxu0
        %v822 = vadd.f32 0.0, %v821
        %v823 = vpop.f32.mrf.mxu0
        %v824 = vadd.f32 0.0, %v823
        %825 = vdwg.mxu0
        %v828 = vunpack.c.l.b16 %v741
        %v829 = vunpack.c.l.b16 %v742
        %v830 = vpack.c.b16 %v829, %v828
        %832 = vmatpush.bf16.msra.mxu0 0
        %833 = vmatpush.bf16.msra.mxu0 0
        %834 = vmatpush.bf16.msra.mxu0 0
        %835 = vmatpush.bf16.msra.mxu0 0
        %836 = vmatpush.bf16.msra.mxu0 0
        %837 = vmatpush.bf16.msra.mxu0 0
        %838 = vmatpush.bf16.msra.mxu0 0
        %839 = vmatpush.bf16.msra.mxu0 %v830
        %840 = vmatmul.bf16.gmra.mxu0 %v790
        %v841 = vpop.f32.mrf.mxu0
        %v842 = vadd.f32 0.0, %v841
        %v843 = vpop.f32.mrf.mxu0
        %v844 = vadd.f32 0.0, %v843
        %845 = vdwg.mxu0
        %v848 = vunpack.c.l.b16 %v743
        %v849 = vunpack.c.l.b16 %v744
        %v850 = vpack.c.b16 %v849, %v848
        %852 = vmatpush.bf16.msra.mxu0 0
        %853 = vmatpush.bf16.msra.mxu0 0
        %854 = vmatpush.bf16.msra.mxu0 0
        %855 = vmatpush.bf16.msra.mxu0 0
        %856 = vmatpush.bf16.msra.mxu0 0
        %857 = vmatpush.bf16.msra.mxu0 0
        %858 = vmatpush.bf16.msra.mxu0 0
        %859 = vmatpush.bf16.msra.mxu0 %v850
        %860 = vmatmul.bf16.gmra.mxu0 %v790
        %v861 = vpop.f32.mrf.mxu0
        %v862 = vadd.f32 0.0, %v861
        %v863 = vpop.f32.mrf.mxu0
        %v864 = vadd.f32 0.0, %v863
        %865 = vdwg.mxu0
        %v868 = vunpack.c.l.b16 %v691
        %v869 = vunpack.c.l.b16 %v692
        %v870 = vpack.c.b16 %v869, %v868
        %v873 = vunpack.c.l.b16 %v769
        %v874 = vunpack.c.l.b16 %v770
        %v875 = vpack.c.b16 %v874, %v873
        %v878 = vsel %vm788, %v870, 0
        %880 = vmatpush.bf16.msra.mxu0 0
        %881 = vmatpush.bf16.msra.mxu0 0
        %882 = vmatpush.bf16.msra.mxu0 0
        %883 = vmatpush.bf16.msra.mxu0 0
        %884 = vmatpush.bf16.msra.mxu0 0
        %885 = vmatpush.bf16.msra.mxu0 0
        %886 = vmatpush.bf16.msra.mxu0 0
        %887 = vmatpush.bf16.msra.mxu0 %v875
        %888 = vmatmul.bf16.gmra.mxu0 %v878
        %v889 = vpop.f32.mrf.mxu0
        %v890 = vadd.f32 0.0, %v889
        %v891 = vpop.f32.mrf.mxu0
        %v892 = vadd.f32 0.0, %v891
        %893 = vdwg.mxu0
        %v896 = vunpack.c.l.b16 %v771
        %v897 = vunpack.c.l.b16 %v772
        %v898 = vpack.c.b16 %v897, %v896
        %900 = vmatpush.bf16.msra.mxu0 0
        %901 = vmatpush.bf16.msra.mxu0 0
        %902 = vmatpush.bf16.msra.mxu0 0
        %903 = vmatpush.bf16.msra.mxu0 0
        %904 = vmatpush.bf16.msra.mxu0 0
        %905 = vmatpush.bf16.msra.mxu0 0
        %906 = vmatpush.bf16.msra.mxu0 0
        %907 = vmatpush.bf16.msra.mxu0 %v898
        %908 = vmatmul.bf16.gmra.mxu0 %v878
        %v909 = vpop.f32.mrf.mxu0
        %v910 = vadd.f32 0.0, %v909
        %v911 = vpop.f32.mrf.mxu0
        %v912 = vadd.f32 0.0, %v911
        %913 = vdwg.mxu0
        %v916 = vunpack.c.l.b16 %v773
        %v917 = vunpack.c.l.b16 %v774
        %v918 = vpack.c.b16 %v917, %v916
        %920 = vmatpush.bf16.msra.mxu0 0
        %921 = vmatpush.bf16.msra.mxu0 0
        %922 = vmatpush.bf16.msra.mxu0 0
        %923 = vmatpush.bf16.msra.mxu0 0
        %924 = vmatpush.bf16.msra.mxu0 0
        %925 = vmatpush.bf16.msra.mxu0 0
        %926 = vmatpush.bf16.msra.mxu0 0
        %927 = vmatpush.bf16.msra.mxu0 %v918
        %928 = vmatmul.bf16.gmra.mxu0 %v878
        %v929 = vpop.f32.mrf.mxu0
        %v930 = vadd.f32 0.0, %v929
        %v931 = vpop.f32.mrf.mxu0
        %v932 = vadd.f32 0.0, %v931
        %933 = vdwg.mxu0
        %v936 = vunpack.c.l.b16 %v775
        %v937 = vunpack.c.l.b16 %v776
        %v938 = vpack.c.b16 %v937, %v936
        %940 = vmatpush.bf16.msra.mxu0 0
        %941 = vmatpush.bf16.msra.mxu0 0
        %942 = vmatpush.bf16.msra.mxu0 0
        %943 = vmatpush.bf16.msra.mxu0 0
        %944 = vmatpush.bf16.msra.mxu0 0
        %945 = vmatpush.bf16.msra.mxu0 0
        %946 = vmatpush.bf16.msra.mxu0 0
        %947 = vmatpush.bf16.msra.mxu0 %v938
        %948 = vmatmul.bf16.gmra.mxu0 %v878
        %v949 = vpop.f32.mrf.mxu0
        %v950 = vadd.f32 0.0, %v949
        %v951 = vpop.f32.mrf.mxu0
        %v952 = vadd.f32 0.0, %v951
        %953 = vdwg.mxu0
        %v954 = vsub.f32 %v802, %v890
        %v955 = vsub.f32 %v804, %v892
        %v956 = vsub.f32 %v822, %v910
        %v957 = vsub.f32 %v824, %v912
        %v958 = vsub.f32 %v842, %v930
        %v959 = vsub.f32 %v844, %v932
        %v960 = vsub.f32 %v862, %v950
        %v961 = vsub.f32 %v864, %v952
        %962 = vmatpush.bf16.msra.mxu0 0
        %963 = vmatpush.bf16.msra.mxu0 0
        %964 = vmatpush.bf16.msra.mxu0 0
        %965 = vmatpush.bf16.msra.mxu0 0
        %966 = vmatpush.bf16.msra.mxu0 0
        %967 = vmatpush.bf16.msra.mxu0 0
        %968 = vmatpush.bf16.msra.mxu0 0
        %969 = vmatpush.bf16.msra.mxu0 %v786
        %970 = vmatmul.bf16.gmra.mxu0 %v878
        %v971 = vpop.f32.mrf.mxu0
        %v972 = vadd.f32 0.0, %v971
        %v973 = vpop.f32.mrf.mxu0
        %v974 = vadd.f32 0.0, %v973
        %975 = vdwg.mxu0
        %976 = vmatpush.bf16.msra.mxu0 0
        %977 = vmatpush.bf16.msra.mxu0 0
        %978 = vmatpush.bf16.msra.mxu0 0
        %979 = vmatpush.bf16.msra.mxu0 0
        %980 = vmatpush.bf16.msra.mxu0 0
        %981 = vmatpush.bf16.msra.mxu0 0
        %982 = vmatpush.bf16.msra.mxu0 0
        %983 = vmatpush.bf16.msra.mxu0 %v810
        %984 = vmatmul.bf16.gmra.mxu0 %v878
        %v985 = vpop.f32.mrf.mxu0
        %v986 = vadd.f32 0.0, %v985
        %v987 = vpop.f32.mrf.mxu0
        %v988 = vadd.f32 0.0, %v987
        %989 = vdwg.mxu0
        %990 = vmatpush.bf16.msra.mxu0 0
        %991 = vmatpush.bf16.msra.mxu0 0
        %992 = vmatpush.bf16.msra.mxu0 0
        %993 = vmatpush.bf16.msra.mxu0 0
        %994 = vmatpush.bf16.msra.mxu0 0
        %995 = vmatpush.bf16.msra.mxu0 0
        %996 = vmatpush.bf16.msra.mxu0 0
        %997 = vmatpush.bf16.msra.mxu0 %v830
        %998 = vmatmul.bf16.gmra.mxu0 %v878
        %v999 = vpop.f32.mrf.mxu0
        %v1000 = vadd.f32 0.0, %v999
        %v1001 = vpop.f32.mrf.mxu0
        %v1002 = vadd.f32 0.0, %v1001
        %1003 = vdwg.mxu0
        %1004 = vmatpush.bf16.msra.mxu0 0
        %1005 = vmatpush.bf16.msra.mxu0 0
        %1006 = vmatpush.bf16.msra.mxu0 0
        %1007 = vmatpush.bf16.msra.mxu0 0
        %1008 = vmatpush.bf16.msra.mxu0 0
        %1009 = vmatpush.bf16.msra.mxu0 0
        %1010 = vmatpush.bf16.msra.mxu0 0
        %1011 = vmatpush.bf16.msra.mxu0 %v850
        %1012 = vmatmul.bf16.gmra.mxu0 %v878
        %v1013 = vpop.f32.mrf.mxu0
        %v1014 = vadd.f32 0.0, %v1013
        %v1015 = vpop.f32.mrf.mxu0
        %v1016 = vadd.f32 0.0, %v1015
        %1017 = vdwg.mxu0
        %1018 = vmatpush.bf16.msra.mxu0 0
        %1019 = vmatpush.bf16.msra.mxu0 0
        %1020 = vmatpush.bf16.msra.mxu0 0
        %1021 = vmatpush.bf16.msra.mxu0 0
        %1022 = vmatpush.bf16.msra.mxu0 0
        %1023 = vmatpush.bf16.msra.mxu0 0
        %1024 = vmatpush.bf16.msra.mxu0 0
        %1025 = vmatpush.bf16.msra.mxu0 %v875
        %1026 = vmatmul.bf16.gmra.mxu0 %v790
        %v1027 = vpop.f32.mrf.mxu0
        %v1028 = vadd.f32 %v972, %v1027
        %v1029 = vpop.f32.mrf.mxu0
        %v1030 = vadd.f32 %v974, %v1029
        %1031 = vdwg.mxu0
        %1032 = vmatpush.bf16.msra.mxu0 0
        %1033 = vmatpush.bf16.msra.mxu0 0
        %1034 = vmatpush.bf16.msra.mxu0 0
        %1035 = vmatpush.bf16.msra.mxu0 0
        %1036 = vmatpush.bf16.msra.mxu0 0
        %1037 = vmatpush.bf16.msra.mxu0 0
        %1038 = vmatpush.bf16.msra.mxu0 0
        %1039 = vmatpush.bf16.msra.mxu0 %v898
        %1040 = vmatmul.bf16.gmra.mxu0 %v790
        %v1041 = vpop.f32.mrf.mxu0
        %v1042 = vadd.f32 %v986, %v1041
        %v1043 = vpop.f32.mrf.mxu0
        %v1044 = vadd.f32 %v988, %v1043
        %1045 = vdwg.mxu0
        %1046 = vmatpush.bf16.msra.mxu0 0
        %1047 = vmatpush.bf16.msra.mxu0 0
        %1048 = vmatpush.bf16.msra.mxu0 0
        %1049 = vmatpush.bf16.msra.mxu0 0
        %1050 = vmatpush.bf16.msra.mxu0 0
        %1051 = vmatpush.bf16.msra.mxu0 0
        %1052 = vmatpush.bf16.msra.mxu0 0
        %1053 = vmatpush.bf16.msra.mxu0 %v918
        %1054 = vmatmul.bf16.gmra.mxu0 %v790
        %v1055 = vpop.f32.mrf.mxu0
        %v1056 = vadd.f32 %v1000, %v1055
        %v1057 = vpop.f32.mrf.mxu0
        %v1058 = vadd.f32 %v1002, %v1057
        %1059 = vdwg.mxu0
        %1060 = vmatpush.bf16.msra.mxu0 0
        %1061 = vmatpush.bf16.msra.mxu0 0
        %1062 = vmatpush.bf16.msra.mxu0 0
        %1063 = vmatpush.bf16.msra.mxu0 0
        %1064 = vmatpush.bf16.msra.mxu0 0
        %1065 = vmatpush.bf16.msra.mxu0 0
        %1066 = vmatpush.bf16.msra.mxu0 0
        %1067 = vmatpush.bf16.msra.mxu0 %v938
        %1068 = vmatmul.bf16.gmra.mxu0 %v790
        %v1069 = vpop.f32.mrf.mxu0
        %v1070 = vadd.f32 %v1014, %v1069
        %v1071 = vpop.f32.mrf.mxu0
        %v1072 = vadd.f32 %v1016, %v1071
        %1073 = vdwg.mxu0
        %v1074 = vpack.c.bf16 %v955, %v954
        %v1075 = vpack.c.bf16 %v957, %v956
        %v1076 = vpack.c.bf16 %v959, %v958
        %v1077 = vpack.c.bf16 %v961, %v960
        %v1078 = vpack.c.bf16 %v1030, %v1028
        %v1079 = vpack.c.bf16 %v1044, %v1042
        %v1080 = vpack.c.bf16 %v1058, %v1056
        %v1081 = vpack.c.bf16 %v1072, %v1070
        %v1084 = vunpack.c.l.b16 %v693
        %v1085 = vunpack.c.l.b16 %v694
        %v1086 = vpack.c.b16 %v1085, %v1084
        %v1089 = vsel %vm788, %v1074, 0
        %v1092 = vsel %vm788, %v1075, 0
        %v1095 = vsel %vm788, %v1076, 0
        %v1098 = vsel %vm788, %v1077, 0
        %1100 = vmatpush.bf16.msra.mxu0 0
        %1101 = vmatpush.bf16.msra.mxu0 0
        %1102 = vmatpush.bf16.msra.mxu0 0
        %1103 = vmatpush.bf16.msra.mxu0 0
        %1104 = vmatpush.bf16.msra.mxu0 0
        %1105 = vmatpush.bf16.msra.mxu0 0
        %1106 = vmatpush.bf16.msra.mxu0 0
        %1107 = vmatpush.bf16.msra.mxu0 %v1086
        %1108 = vmatmul.bf16.gmra.mxu0 %v1089
        %v1109 = vpop.f32.mrf.mxu0
        %v1110 = vadd.f32 0.0, %v1109
        %v1111 = vpop.f32.mrf.mxu0
        %v1112 = vadd.f32 0.0, %v1111
        %1113 = vmatmul.bf16.gmra.mxu0 %v1092
        %v1114 = vpop.f32.mrf.mxu0
        %v1115 = vadd.f32 0.0, %v1114
        %v1116 = vpop.f32.mrf.mxu0
        %v1117 = vadd.f32 0.0, %v1116
        %1118 = vmatmul.bf16.gmra.mxu0 %v1095
        %v1119 = vpop.f32.mrf.mxu0
        %v1120 = vadd.f32 0.0, %v1119
        %v1121 = vpop.f32.mrf.mxu0
        %v1122 = vadd.f32 0.0, %v1121
        %1123 = vmatmul.bf16.gmra.mxu0 %v1098
        %v1124 = vpop.f32.mrf.mxu0
        %v1125 = vadd.f32 0.0, %v1124
        %v1126 = vpop.f32.mrf.mxu0
        %v1127 = vadd.f32 0.0, %v1126
        %1128 = vdwg.mxu0
        %v1131 = vunpack.c.l.b16 %v695
        %v1132 = vunpack.c.l.b16 %v696
        %v1133 = vpack.c.b16 %v1132, %v1131
        %v1136 = vsel %vm788, %v1078, 0
        %v1139 = vsel %vm788, %v1079, 0
        %v1142 = vsel %vm788, %v1080, 0
        %v1145 = vsel %vm788, %v1081, 0
        %1147 = vmatpush.bf16.msra.mxu0 0
        %1148 = vmatpush.bf16.msra.mxu0 0
        %1149 = vmatpush.bf16.msra.mxu0 0
        %1150 = vmatpush.bf16.msra.mxu0 0
        %1151 = vmatpush.bf16.msra.mxu0 0
        %1152 = vmatpush.bf16.msra.mxu0 0
        %1153 = vmatpush.bf16.msra.mxu0 0
        %1154 = vmatpush.bf16.msra.mxu0 %v1133
        %1155 = vmatmul.bf16.gmra.mxu0 %v1136
        %v1156 = vpop.f32.mrf.mxu0
        %v1157 = vadd.f32 0.0, %v1156
        %v1158 = vpop.f32.mrf.mxu0
        %v1159 = vadd.f32 0.0, %v1158
        %1160 = vmatmul.bf16.gmra.mxu0 %v1139
        %v1161 = vpop.f32.mrf.mxu0
        %v1162 = vadd.f32 0.0, %v1161
        %v1163 = vpop.f32.mrf.mxu0
        %v1164 = vadd.f32 0.0, %v1163
        %1165 = vmatmul.bf16.gmra.mxu0 %v1142
        %v1166 = vpop.f32.mrf.mxu0
        %v1167 = vadd.f32 0.0, %v1166
        %v1168 = vpop.f32.mrf.mxu0
        %v1169 = vadd.f32 0.0, %v1168
        %1170 = vmatmul.bf16.gmra.mxu0 %v1145
        %v1171 = vpop.f32.mrf.mxu0
        %v1172 = vadd.f32 0.0, %v1171
        %v1173 = vpop.f32.mrf.mxu0
        %v1174 = vadd.f32 0.0, %v1173
        %1175 = vdwg.mxu0
        %v1176 = vsub.f32 %v1110, %v1157
        %v1177 = vsub.f32 %v1112, %v1159
        %v1178 = vsub.f32 %v1115, %v1162
        %v1179 = vsub.f32 %v1117, %v1164
        %v1180 = vsub.f32 %v1120, %v1167
        %v1181 = vsub.f32 %v1122, %v1169
        %v1182 = vsub.f32 %v1125, %v1172
        %v1183 = vsub.f32 %v1127, %v1174
        %1184 = vmatpush.bf16.msra.mxu0 0
        %1185 = vmatpush.bf16.msra.mxu0 0
        %1186 = vmatpush.bf16.msra.mxu0 0
        %1187 = vmatpush.bf16.msra.mxu0 0
        %1188 = vmatpush.bf16.msra.mxu0 0
        %1189 = vmatpush.bf16.msra.mxu0 0
        %1190 = vmatpush.bf16.msra.mxu0 0
        %1191 = vmatpush.bf16.msra.mxu0 %v1086
        %1192 = vmatmul.bf16.gmra.mxu0 %v1136
        %v1193 = vpop.f32.mrf.mxu0
        %v1194 = vadd.f32 0.0, %v1193
        %v1195 = vpop.f32.mrf.mxu0
        %v1196 = vadd.f32 0.0, %v1195
        %1197 = vmatmul.bf16.gmra.mxu0 %v1139
        %v1198 = vpop.f32.mrf.mxu0
        %v1199 = vadd.f32 0.0, %v1198
        %v1200 = vpop.f32.mrf.mxu0
        %v1201 = vadd.f32 0.0, %v1200
        %1202 = vmatmul.bf16.gmra.mxu0 %v1142
        %v1203 = vpop.f32.mrf.mxu0
        %v1204 = vadd.f32 0.0, %v1203
        %v1205 = vpop.f32.mrf.mxu0
        %v1206 = vadd.f32 0.0, %v1205
        %1207 = vmatmul.bf16.gmra.mxu0 %v1145
        %v1208 = vpop.f32.mrf.mxu0
        %v1209 = vadd.f32 0.0, %v1208
        %v1210 = vpop.f32.mrf.mxu0
        %v1211 = vadd.f32 0.0, %v1210
        %1212 = vdwg.mxu0
        %1213 = vmatpush.bf16.msra.mxu0 0
        %1214 = vmatpush.bf16.msra.mxu0 0
        %1215 = vmatpush.bf16.msra.mxu0 0
        %1216 = vmatpush.bf16.msra.mxu0 0
        %1217 = vmatpush.bf16.msra.mxu0 0
        %1218 = vmatpush.bf16.msra.mxu0 0
        %1219 = vmatpush.bf16.msra.mxu0 0
        %1220 = vmatpush.bf16.msra.mxu0 %v1133
        %1221 = vmatmul.bf16.gmra.mxu0 %v1089
        %v1222 = vpop.f32.mrf.mxu0
        %v1223 = vadd.f32 %v1194, %v1222
        %v1224 = vpop.f32.mrf.mxu0
        %v1225 = vadd.f32 %v1196, %v1224
        %1226 = vmatmul.bf16.gmra.mxu0 %v1092
        %v1227 = vpop.f32.mrf.mxu0
        %v1228 = vadd.f32 %v1199, %v1227
        %v1229 = vpop.f32.mrf.mxu0
        %v1230 = vadd.f32 %v1201, %v1229
        %1231 = vmatmul.bf16.gmra.mxu0 %v1095
        %v1232 = vpop.f32.mrf.mxu0
        %v1233 = vadd.f32 %v1204, %v1232
        %v1234 = vpop.f32.mrf.mxu0
        %v1235 = vadd.f32 %v1206, %v1234
        %1236 = vmatmul.bf16.gmra.mxu0 %v1098
        %v1237 = vpop.f32.mrf.mxu0
        %v1238 = vadd.f32 %v1209, %v1237
        %v1239 = vpop.f32.mrf.mxu0
        %v1240 = vadd.f32 %v1211, %v1239
        %1241 = vdwg.mxu0
        %v1242 = vmul.f32 %v1176, %v687
        %v1243 = vmul.f32 %v1177, %v688
        %v1244 = vmul.f32 %v1178, %v687
        %v1245 = vmul.f32 %v1179, %v688
        %v1246 = vmul.f32 %v1180, %v687
        %v1247 = vmul.f32 %v1181, %v688
        %v1248 = vmul.f32 %v1182, %v687
        %v1249 = vmul.f32 %v1183, %v688
        %v1250 = vmul.f32 %v1223, %v687
        %v1251 = vmul.f32 %v1225, %v688
        %v1252 = vmul.f32 %v1228, %v687
        %v1253 = vmul.f32 %v1230, %v688
        %v1254 = vmul.f32 %v1233, %v687
        %v1255 = vmul.f32 %v1235, %v688
        %v1256 = vmul.f32 %v1238, %v687
        %v1257 = vmul.f32 %v1240, %v688
        %v1258 = vunpack.c.l.bf16 %v671
        %v1259 = vunpack.c.l.bf16 %v672
        %v1260 = vunpack.c.l.bf16 %v673
        %v1261 = vunpack.c.l.bf16 %v674
        %v1262 = vunpack.c.l.bf16 %v675
        %v1263 = vunpack.c.l.bf16 %v676
        %v1264 = vunpack.c.l.bf16 %v677
        %v1265 = vunpack.c.l.bf16 %v678
        %v1266 = vsub.f32 %v1242, %v1258
        %v1267 = vsub.f32 %v1243, %v1259
        %v1268 = vsub.f32 %v1244, %v1260
        %v1269 = vsub.f32 %v1245, %v1261
        %v1270 = vsub.f32 %v1246, %v1262
        %v1271 = vsub.f32 %v1247, %v1263
        %v1272 = vsub.f32 %v1248, %v1264
        %v1273 = vsub.f32 %v1249, %v1265
        %v1274 = vpack.c.bf16 %v1267, %v1266
        %v1275 = vpack.c.bf16 %v1269, %v1268
        %v1276 = vpack.c.bf16 %v1271, %v1270
        %v1277 = vpack.c.bf16 %v1273, %v1272
        %v1278 = vunpack.c.l.bf16 %v679
        %v1279 = vunpack.c.l.bf16 %v680
        %v1280 = vunpack.c.l.bf16 %v681
        %v1281 = vunpack.c.l.bf16 %v682
        %v1282 = vunpack.c.l.bf16 %v683
        %v1283 = vunpack.c.l.bf16 %v684
        %v1284 = vunpack.c.l.bf16 %v685
        %v1285 = vunpack.c.l.bf16 %v686
        %v1286 = vsub.f32 %v1250, %v1278
        %v1287 = vsub.f32 %v1251, %v1279
        %v1288 = vsub.f32 %v1252, %v1280
        %v1289 = vsub.f32 %v1253, %v1281
        %v1290 = vsub.f32 %v1254, %v1282
        %v1291 = vsub.f32 %v1255, %v1283
        %v1292 = vsub.f32 %v1256, %v1284
        %v1293 = vsub.f32 %v1257, %v1285
        %v1294 = vpack.c.bf16 %v1287, %v1286
        %v1295 = vpack.c.bf16 %v1289, %v1288
        %v1296 = vpack.c.bf16 %v1291, %v1290
        %v1297 = vpack.c.bf16 %v1293, %v1292
        %v1299 = vsel %vm788, %v1294, 0
        %v1302 = vsel %vm788, %v1295, 0
        %v1305 = vsel %vm788, %v1296, 0
        %v1308 = vsel %vm788, %v1297, 0
        %1310 = vmatpush.bf16.msra.mxu0 0
        %1311 = vmatpush.bf16.msra.mxu0 0
        %1312 = vmatpush.bf16.msra.mxu0 0
        %1313 = vmatpush.bf16.msra.mxu0 0
        %1314 = vmatpush.bf16.msra.mxu0 0
        %1315 = vmatpush.bf16.msra.mxu0 0
        %1316 = vmatpush.bf16.msra.mxu0 0
        %1317 = vmatpush.bf16.msra.mxu0 %v1133
        %1318 = vmatmul.bf16.gmra.mxu0 %v1299
        %v1319 = vpop.f32.mrf.mxu0
        %v1320 = vadd.f32 0.0, %v1319
        %v1321 = vpop.f32.mrf.mxu0
        %v1322 = vadd.f32 0.0, %v1321
        %1323 = vmatmul.bf16.gmra.mxu0 %v1302
        %v1324 = vpop.f32.mrf.mxu0
        %v1325 = vadd.f32 0.0, %v1324
        %v1326 = vpop.f32.mrf.mxu0
        %v1327 = vadd.f32 0.0, %v1326
        %1328 = vmatmul.bf16.gmra.mxu0 %v1305
        %v1329 = vpop.f32.mrf.mxu0
        %v1330 = vadd.f32 0.0, %v1329
        %v1331 = vpop.f32.mrf.mxu0
        %v1332 = vadd.f32 0.0, %v1331
        %1333 = vmatmul.bf16.gmra.mxu0 %v1308
        %v1334 = vpop.f32.mrf.mxu0
        %v1335 = vadd.f32 0.0, %v1334
        %v1336 = vpop.f32.mrf.mxu0
        %v1337 = vadd.f32 0.0, %v1336
        %1338 = vdwg.mxu0
        %v1340 = vsel %vm788, %v1274, 0
        %v1343 = vsel %vm788, %v1275, 0
        %v1346 = vsel %vm788, %v1276, 0
        %v1349 = vsel %vm788, %v1277, 0
        %1351 = vmatpush.bf16.msra.mxu0 0
        %1352 = vmatpush.bf16.msra.mxu0 0
        %1353 = vmatpush.bf16.msra.mxu0 0
        %1354 = vmatpush.bf16.msra.mxu0 0
        %1355 = vmatpush.bf16.msra.mxu0 0
        %1356 = vmatpush.bf16.msra.mxu0 0
        %1357 = vmatpush.bf16.msra.mxu0 0
        %1358 = vmatpush.bf16.msra.mxu0 %v1086
        %1359 = vmatmul.bf16.gmra.mxu0 %v1340
        %v1360 = vpop.f32.mrf.mxu0
        %v1361 = vadd.f32 %v1320, %v1360
        %v1362 = vpop.f32.mrf.mxu0
        %v1363 = vadd.f32 %v1322, %v1362
        %1364 = vmatmul.bf16.gmra.mxu0 %v1343
        %v1365 = vpop.f32.mrf.mxu0
        %v1366 = vadd.f32 %v1325, %v1365
        %v1367 = vpop.f32.mrf.mxu0
        %v1368 = vadd.f32 %v1327, %v1367
        %1369 = vmatmul.bf16.gmra.mxu0 %v1346
        %v1370 = vpop.f32.mrf.mxu0
        %v1371 = vadd.f32 %v1330, %v1370
        %v1372 = vpop.f32.mrf.mxu0
        %v1373 = vadd.f32 %v1332, %v1372
        %1374 = vmatmul.bf16.gmra.mxu0 %v1349
        %v1375 = vpop.f32.mrf.mxu0
        %v1376 = vadd.f32 %v1335, %v1375
        %v1377 = vpop.f32.mrf.mxu0
        %v1378 = vadd.f32 %v1337, %v1377
        %1379 = vdwg.mxu0
        %1380 = vmatpush.bf16.msra.mxu0 0
        %1381 = vmatpush.bf16.msra.mxu0 0
        %1382 = vmatpush.bf16.msra.mxu0 0
        %1383 = vmatpush.bf16.msra.mxu0 0
        %1384 = vmatpush.bf16.msra.mxu0 0
        %1385 = vmatpush.bf16.msra.mxu0 0
        %1386 = vmatpush.bf16.msra.mxu0 0
        %1387 = vmatpush.bf16.msra.mxu0 %v1086
        %1388 = vmatmul.bf16.gmra.mxu0 %v1299
        %v1389 = vpop.f32.mrf.mxu0
        %v1390 = vadd.f32 0.0, %v1389
        %v1391 = vpop.f32.mrf.mxu0
        %v1392 = vadd.f32 0.0, %v1391
        %1393 = vmatmul.bf16.gmra.mxu0 %v1302
        %v1394 = vpop.f32.mrf.mxu0
        %v1395 = vadd.f32 0.0, %v1394
        %v1396 = vpop.f32.mrf.mxu0
        %v1397 = vadd.f32 0.0, %v1396
        %1398 = vmatmul.bf16.gmra.mxu0 %v1305
        %v1399 = vpop.f32.mrf.mxu0
        %v1400 = vadd.f32 0.0, %v1399
        %v1401 = vpop.f32.mrf.mxu0
        %v1402 = vadd.f32 0.0, %v1401
        %1403 = vmatmul.bf16.gmra.mxu0 %v1308
        %v1404 = vpop.f32.mrf.mxu0
        %v1405 = vadd.f32 0.0, %v1404
        %v1406 = vpop.f32.mrf.mxu0
        %v1407 = vadd.f32 0.0, %v1406
        %1408 = vdwg.mxu0
        %1409 = vmatpush.bf16.msra.mxu0 0
        %1410 = vmatpush.bf16.msra.mxu0 0
        %1411 = vmatpush.bf16.msra.mxu0 0
        %1412 = vmatpush.bf16.msra.mxu0 0
        %1413 = vmatpush.bf16.msra.mxu0 0
        %1414 = vmatpush.bf16.msra.mxu0 0
        %1415 = vmatpush.bf16.msra.mxu0 0
        %1416 = vmatpush.bf16.msra.mxu0 %v1133
        %1417 = vmatmul.bf16.gmra.mxu0 %v1340
        %v1418 = vpop.f32.mrf.mxu0
        %v1419 = vadd.f32 0.0, %v1418
        %v1420 = vpop.f32.mrf.mxu0
        %v1421 = vadd.f32 0.0, %v1420
        %1422 = vmatmul.bf16.gmra.mxu0 %v1343
        %v1423 = vpop.f32.mrf.mxu0
        %v1424 = vadd.f32 0.0, %v1423
        %v1425 = vpop.f32.mrf.mxu0
        %v1426 = vadd.f32 0.0, %v1425
        %1427 = vmatmul.bf16.gmra.mxu0 %v1346
        %v1428 = vpop.f32.mrf.mxu0
        %v1429 = vadd.f32 0.0, %v1428
        %v1430 = vpop.f32.mrf.mxu0
        %v1431 = vadd.f32 0.0, %v1430
        %1432 = vmatmul.bf16.gmra.mxu0 %v1349
        %v1433 = vpop.f32.mrf.mxu0
        %v1434 = vadd.f32 0.0, %v1433
        %v1435 = vpop.f32.mrf.mxu0
        %v1436 = vadd.f32 0.0, %v1435
        %1437 = vdwg.mxu0
        %v1438 = vsub.f32 %v1390, %v1419
        %v1439 = vsub.f32 %v1392, %v1421
        %v1440 = vsub.f32 %v1395, %v1424
        %v1441 = vsub.f32 %v1397, %v1426
        %v1442 = vsub.f32 %v1400, %v1429
        %v1443 = vsub.f32 %v1402, %v1431
        %v1444 = vsub.f32 %v1405, %v1434
        %v1445 = vsub.f32 %v1407, %v1436
        %v1446 = vpack.c.bf16 %v1361, %v1361
        %v1447 = vpack.c.bf16 %v1363, %v1363
        %v1448 = vpack.c.bf16 %v1366, %v1366
        %v1449 = vpack.c.bf16 %v1368, %v1368
        %v1450 = vpack.c.bf16 %v1371, %v1371
        %v1451 = vpack.c.bf16 %v1373, %v1373
        %v1452 = vpack.c.bf16 %v1376, %v1376
        %v1453 = vpack.c.bf16 %v1378, %v1378
        %v1454 = vpack.c.bf16 %v1438, %v1438
        %v1455 = vpack.c.bf16 %v1439, %v1439
        %v1456 = vpack.c.bf16 %v1440, %v1440
        %v1457 = vpack.c.bf16 %v1441, %v1441
        %v1458 = vpack.c.bf16 %v1442, %v1442
        %v1459 = vpack.c.bf16 %v1443, %v1443
        %v1460 = vpack.c.bf16 %v1444, %v1444
        %v1461 = vpack.c.bf16 %v1445, %v1445
        %v1464 = vunpack.c.l.b16 %v1454
        %v1465 = vunpack.c.l.b16 %v1455
        %v1466 = vpack.c.b16 %v1465, %v1464
        %1468 = vmatpush.bf16.msra.mxu0 0
        %1469 = vmatpush.bf16.msra.mxu0 0
        %1470 = vmatpush.bf16.msra.mxu0 0
        %1471 = vmatpush.bf16.msra.mxu0 0
        %1472 = vmatpush.bf16.msra.mxu0 0
        %1473 = vmatpush.bf16.msra.mxu0 0
        %1474 = vmatpush.bf16.msra.mxu0 0
        %1475 = vmatpush.bf16.msra.mxu0 %v1466
        %1476 = vmatmul.bf16.gmra.mxu0 %v878
        %v1477 = vpop.f32.mrf.mxu0
        %v1478 = vadd.f32 0.0, %v1477
        %v1479 = vpop.f32.mrf.mxu0
        %v1480 = vadd.f32 0.0, %v1479
        %1481 = vdwg.mxu0
        %v1484 = vunpack.c.l.b16 %v1456
        %v1485 = vunpack.c.l.b16 %v1457
        %v1486 = vpack.c.b16 %v1485, %v1484
        %1488 = vmatpush.bf16.msra.mxu0 0
        %1489 = vmatpush.bf16.msra.mxu0 0
        %1490 = vmatpush.bf16.msra.mxu0 0
        %1491 = vmatpush.bf16.msra.mxu0 0
        %1492 = vmatpush.bf16.msra.mxu0 0
        %1493 = vmatpush.bf16.msra.mxu0 0
        %1494 = vmatpush.bf16.msra.mxu0 0
        %1495 = vmatpush.bf16.msra.mxu0 %v1486
        %1496 = vmatmul.bf16.gmra.mxu0 %v878
        %v1497 = vpop.f32.mrf.mxu0
        %v1498 = vadd.f32 0.0, %v1497
        %v1499 = vpop.f32.mrf.mxu0
        %v1500 = vadd.f32 0.0, %v1499
        %1501 = vdwg.mxu0
        %v1504 = vunpack.c.l.b16 %v1458
        %v1505 = vunpack.c.l.b16 %v1459
        %v1506 = vpack.c.b16 %v1505, %v1504
        %1508 = vmatpush.bf16.msra.mxu0 0
        %1509 = vmatpush.bf16.msra.mxu0 0
        %1510 = vmatpush.bf16.msra.mxu0 0
        %1511 = vmatpush.bf16.msra.mxu0 0
        %1512 = vmatpush.bf16.msra.mxu0 0
        %1513 = vmatpush.bf16.msra.mxu0 0
        %1514 = vmatpush.bf16.msra.mxu0 0
        %1515 = vmatpush.bf16.msra.mxu0 %v1506
        %1516 = vmatmul.bf16.gmra.mxu0 %v878
        %v1517 = vpop.f32.mrf.mxu0
        %v1518 = vadd.f32 0.0, %v1517
        %v1519 = vpop.f32.mrf.mxu0
        %v1520 = vadd.f32 0.0, %v1519
        %1521 = vdwg.mxu0
        %v1524 = vunpack.c.l.b16 %v1460
        %v1525 = vunpack.c.l.b16 %v1461
        %v1526 = vpack.c.b16 %v1525, %v1524
        %1528 = vmatpush.bf16.msra.mxu0 0
        %1529 = vmatpush.bf16.msra.mxu0 0
        %1530 = vmatpush.bf16.msra.mxu0 0
        %1531 = vmatpush.bf16.msra.mxu0 0
        %1532 = vmatpush.bf16.msra.mxu0 0
        %1533 = vmatpush.bf16.msra.mxu0 0
        %1534 = vmatpush.bf16.msra.mxu0 0
        %1535 = vmatpush.bf16.msra.mxu0 %v1526
        %1536 = vmatmul.bf16.gmra.mxu0 %v878
        %v1537 = vpop.f32.mrf.mxu0
        %v1538 = vadd.f32 0.0, %v1537
        %v1539 = vpop.f32.mrf.mxu0
        %v1540 = vadd.f32 0.0, %v1539
        %1541 = vdwg.mxu0
        %v1544 = vunpack.c.l.b16 %v1446
        %v1545 = vunpack.c.l.b16 %v1447
        %v1546 = vpack.c.b16 %v1545, %v1544
        %1548 = vmatpush.bf16.msra.mxu0 0
        %1549 = vmatpush.bf16.msra.mxu0 0
        %1550 = vmatpush.bf16.msra.mxu0 0
        %1551 = vmatpush.bf16.msra.mxu0 0
        %1552 = vmatpush.bf16.msra.mxu0 0
        %1553 = vmatpush.bf16.msra.mxu0 0
        %1554 = vmatpush.bf16.msra.mxu0 0
        %1555 = vmatpush.bf16.msra.mxu0 %v1546
        %1556 = vmatmul.bf16.gmra.mxu0 %v790
        %v1557 = vpop.f32.mrf.mxu0
        %v1558 = vadd.f32 %v1478, %v1557
        %v1559 = vpop.f32.mrf.mxu0
        %v1560 = vadd.f32 %v1480, %v1559
        %1561 = vdwg.mxu0
        %v1564 = vunpack.c.l.b16 %v1448
        %v1565 = vunpack.c.l.b16 %v1449
        %v1566 = vpack.c.b16 %v1565, %v1564
        %1568 = vmatpush.bf16.msra.mxu0 0
        %1569 = vmatpush.bf16.msra.mxu0 0
        %1570 = vmatpush.bf16.msra.mxu0 0
        %1571 = vmatpush.bf16.msra.mxu0 0
        %1572 = vmatpush.bf16.msra.mxu0 0
        %1573 = vmatpush.bf16.msra.mxu0 0
        %1574 = vmatpush.bf16.msra.mxu0 0
        %1575 = vmatpush.bf16.msra.mxu0 %v1566
        %1576 = vmatmul.bf16.gmra.mxu0 %v790
        %v1577 = vpop.f32.mrf.mxu0
        %v1578 = vadd.f32 %v1498, %v1577
        %v1579 = vpop.f32.mrf.mxu0
        %v1580 = vadd.f32 %v1500, %v1579
        %1581 = vdwg.mxu0
        %v1584 = vunpack.c.l.b16 %v1450
        %v1585 = vunpack.c.l.b16 %v1451
        %v1586 = vpack.c.b16 %v1585, %v1584
        %1588 = vmatpush.bf16.msra.mxu0 0
        %1589 = vmatpush.bf16.msra.mxu0 0
        %1590 = vmatpush.bf16.msra.mxu0 0
        %1591 = vmatpush.bf16.msra.mxu0 0
        %1592 = vmatpush.bf16.msra.mxu0 0
        %1593 = vmatpush.bf16.msra.mxu0 0
        %1594 = vmatpush.bf16.msra.mxu0 0
        %1595 = vmatpush.bf16.msra.mxu0 %v1586
        %1596 = vmatmul.bf16.gmra.mxu0 %v790
        %v1597 = vpop.f32.mrf.mxu0
        %v1598 = vadd.f32 %v1518, %v1597
        %v1599 = vpop.f32.mrf.mxu0
        %v1600 = vadd.f32 %v1520, %v1599
        %1601 = vdwg.mxu0
        %v1604 = vunpack.c.l.b16 %v1452
        %v1605 = vunpack.c.l.b16 %v1453
        %v1606 = vpack.c.b16 %v1605, %v1604
        %1608 = vmatpush.bf16.msra.mxu0 0
        %1609 = vmatpush.bf16.msra.mxu0 0
        %1610 = vmatpush.bf16.msra.mxu0 0
        %1611 = vmatpush.bf16.msra.mxu0 0
        %1612 = vmatpush.bf16.msra.mxu0 0
        %1613 = vmatpush.bf16.msra.mxu0 0
        %1614 = vmatpush.bf16.msra.mxu0 0
        %1615 = vmatpush.bf16.msra.mxu0 %v1606
        %1616 = vmatmul.bf16.gmra.mxu0 %v790
        %v1617 = vpop.f32.mrf.mxu0
        %v1618 = vadd.f32 %v1538, %v1617
        %v1619 = vpop.f32.mrf.mxu0
        %v1620 = vadd.f32 %v1540, %v1619
        %1621 = vdwg.mxu0
        %1622 = vmatpush.bf16.msra.mxu0 0
        %1623 = vmatpush.bf16.msra.mxu0 0
        %1624 = vmatpush.bf16.msra.mxu0 0
        %1625 = vmatpush.bf16.msra.mxu0 0
        %1626 = vmatpush.bf16.msra.mxu0 0
        %1627 = vmatpush.bf16.msra.mxu0 0
        %1628 = vmatpush.bf16.msra.mxu0 0
        %1629 = vmatpush.bf16.msra.mxu0 %v1466
        %1630 = vmatmul.bf16.gmra.mxu0 %v790
        %v1631 = vpop.f32.mrf.mxu0
        %v1632 = vadd.f32 0.0, %v1631
        %v1633 = vpop.f32.mrf.mxu0
        %v1634 = vadd.f32 0.0, %v1633
        %1635 = vdwg.mxu0
        %1636 = vmatpush.bf16.msra.mxu0 0
        %1637 = vmatpush.bf16.msra.mxu0 0
        %1638 = vmatpush.bf16.msra.mxu0 0
        %1639 = vmatpush.bf16.msra.mxu0 0
        %1640 = vmatpush.bf16.msra.mxu0 0
        %1641 = vmatpush.bf16.msra.mxu0 0
        %1642 = vmatpush.bf16.msra.mxu0 0
        %1643 = vmatpush.bf16.msra.mxu0 %v1486
        %1644 = vmatmul.bf16.gmra.mxu0 %v790
        %v1645 = vpop.f32.mrf.mxu0
        %v1646 = vadd.f32 0.0, %v1645
        %v1647 = vpop.f32.mrf.mxu0
        %v1648 = vadd.f32 0.0, %v1647
        %1649 = vdwg.mxu0
        %1650 = vmatpush.bf16.msra.mxu0 0
        %1651 = vmatpush.bf16.msra.mxu0 0
        %1652 = vmatpush.bf16.msra.mxu0 0
        %1653 = vmatpush.bf16.msra.mxu0 0
        %1654 = vmatpush.bf16.msra.mxu0 0
        %1655 = vmatpush.bf16.msra.mxu0 0
        %1656 = vmatpush.bf16.msra.mxu0 0
        %1657 = vmatpush.bf16.msra.mxu0 %v1506
        %1658 = vmatmul.bf16.gmra.mxu0 %v790
        %v1659 = vpop.f32.mrf.mxu0
        %v1660 = vadd.f32 0.0, %v1659
        %v1661 = vpop.f32.mrf.mxu0
        %v1662 = vadd.f32 0.0, %v1661
        %1663 = vdwg.mxu0
        %1664 = vmatpush.bf16.msra.mxu0 0
        %1665 = vmatpush.bf16.msra.mxu0 0
        %1666 = vmatpush.bf16.msra.mxu0 0
        %1667 = vmatpush.bf16.msra.mxu0 0
        %1668 = vmatpush.bf16.msra.mxu0 0
        %1669 = vmatpush.bf16.msra.mxu0 0
        %1670 = vmatpush.bf16.msra.mxu0 0
        %1671 = vmatpush.bf16.msra.mxu0 %v1526
        %1672 = vmatmul.bf16.gmra.mxu0 %v790
        %v1673 = vpop.f32.mrf.mxu0
        %v1674 = vadd.f32 0.0, %v1673
        %v1675 = vpop.f32.mrf.mxu0
        %v1676 = vadd.f32 0.0, %v1675
        %1677 = vdwg.mxu0
        %1678 = vmatpush.bf16.msra.mxu0 0
        %1679 = vmatpush.bf16.msra.mxu0 0
        %1680 = vmatpush.bf16.msra.mxu0 0
        %1681 = vmatpush.bf16.msra.mxu0 0
        %1682 = vmatpush.bf16.msra.mxu0 0
        %1683 = vmatpush.bf16.msra.mxu0 0
        %1684 = vmatpush.bf16.msra.mxu0 0
        %1685 = vmatpush.bf16.msra.mxu0 %v1546
        %1686 = vmatmul.bf16.gmra.mxu0 %v878
        %v1687 = vpop.f32.mrf.mxu0
        %v1688 = vadd.f32 0.0, %v1687
        %v1689 = vpop.f32.mrf.mxu0
        %v1690 = vadd.f32 0.0, %v1689
        %1691 = vdwg.mxu0
        %1692 = vmatpush.bf16.msra.mxu0 0
        %1693 = vmatpush.bf16.msra.mxu0 0
        %1694 = vmatpush.bf16.msra.mxu0 0
        %1695 = vmatpush.bf16.msra.mxu0 0
        %1696 = vmatpush.bf16.msra.mxu0 0
        %1697 = vmatpush.bf16.msra.mxu0 0
        %1698 = vmatpush.bf16.msra.mxu0 0
        %1699 = vmatpush.bf16.msra.mxu0 %v1566
        %1700 = vmatmul.bf16.gmra.mxu0 %v878
        %v1701 = vpop.f32.mrf.mxu0
        %v1702 = vadd.f32 0.0, %v1701
        %v1703 = vpop.f32.mrf.mxu0
        %v1704 = vadd.f32 0.0, %v1703
        %1705 = vdwg.mxu0
        %1706 = vmatpush.bf16.msra.mxu0 0
        %1707 = vmatpush.bf16.msra.mxu0 0
        %1708 = vmatpush.bf16.msra.mxu0 0
        %1709 = vmatpush.bf16.msra.mxu0 0
        %1710 = vmatpush.bf16.msra.mxu0 0
        %1711 = vmatpush.bf16.msra.mxu0 0
        %1712 = vmatpush.bf16.msra.mxu0 0
        %1713 = vmatpush.bf16.msra.mxu0 %v1586
        %1714 = vmatmul.bf16.gmra.mxu0 %v878
        %v1715 = vpop.f32.mrf.mxu0
        %v1716 = vadd.f32 0.0, %v1715
        %v1717 = vpop.f32.mrf.mxu0
        %v1718 = vadd.f32 0.0, %v1717
        %1719 = vdwg.mxu0
        %1720 = vmatpush.bf16.msra.mxu0 0
        %1721 = vmatpush.bf16.msra.mxu0 0
        %1722 = vmatpush.bf16.msra.mxu0 0
        %1723 = vmatpush.bf16.msra.mxu0 0
        %1724 = vmatpush.bf16.msra.mxu0 0
        %1725 = vmatpush.bf16.msra.mxu0 0
        %1726 = vmatpush.bf16.msra.mxu0 0
        %1727 = vmatpush.bf16.msra.mxu0 %v1606
        %1728 = vmatmul.bf16.gmra.mxu0 %v878
        %v1729 = vpop.f32.mrf.mxu0
        %v1730 = vadd.f32 0.0, %v1729
        %v1731 = vpop.f32.mrf.mxu0
        %v1732 = vadd.f32 0.0, %v1731
        %1733 = vdwg.mxu0
        %v1734 = vsub.f32 %v1632, %v1688
        %v1735 = vsub.f32 %v1634, %v1690
        %v1736 = vsub.f32 %v1646, %v1702
        %v1737 = vsub.f32 %v1648, %v1704
        %v1738 = vsub.f32 %v1660, %v1716
        %v1739 = vsub.f32 %v1662, %v1718
        %v1740 = vsub.f32 %v1674, %v1730
        %v1741 = vsub.f32 %v1676, %v1732
        %v1742 = vmul.f32 %v697, %v1558
        %v1743 = vmul.f32 %v698, %v1560
        %v1744 = vmul.f32 %v699, %v1578
        %v1745 = vmul.f32 %v700, %v1580
        %v1746 = vmul.f32 %v701, %v1598
        %v1747 = vmul.f32 %v702, %v1600
        %v1748 = vmul.f32 %v703, %v1618
        %v1749 = vmul.f32 %v704, %v1620
        %v1750 = vmul.f32 %v713, %v1734
        %v1751 = vmul.f32 %v714, %v1735
        %v1752 = vmul.f32 %v715, %v1736
        %v1753 = vmul.f32 %v716, %v1737
        %v1754 = vmul.f32 %v717, %v1738
        %v1755 = vmul.f32 %v718, %v1739
        %v1756 = vmul.f32 %v719, %v1740
        %v1757 = vmul.f32 %v720, %v1741
        %v1758 = vadd.f32 %v1742, %v1750
        %v1759 = vadd.f32 %v1743, %v1751
        %v1760 = vadd.f32 %v1744, %v1752
        %v1761 = vadd.f32 %v1745, %v1753
        %v1762 = vadd.f32 %v1746, %v1754
        %v1763 = vadd.f32 %v1747, %v1755
        %v1764 = vadd.f32 %v1748, %v1756
        %v1765 = vadd.f32 %v1749, %v1757
        %v1766 = vsel %vm788, %v1758, 0.0
        %v1767 = vsel %vm788, %v1760, 0.0
        %v1768 = vadd.f32 %v1766, %v1767
        %v1769 = vsel %vm788, %v1762, 0.0
        %v1770 = vadd.f32 %v1768, %v1769
        %v1771 = vsel %vm788, %v1764, 0.0
        %v1772 = vadd.f32 %v1770, %v1771
        %v1773 = vsel %vm788, %v1759, 0.0
        %v1774 = vsel %vm788, %v1761, 0.0
        %v1775 = vadd.f32 %v1773, %v1774
        %v1776 = vsel %vm788, %v1763, 0.0
        %v1777 = vadd.f32 %v1775, %v1776
        %v1778 = vsel %vm788, %v1765, 0.0
        %v1779 = vadd.f32 %v1777, %v1778
        %v1780 = vmul.f32 %v697, %v1734
        %v1781 = vmul.f32 %v698, %v1735
        %v1782 = vmul.f32 %v699, %v1736
        %v1783 = vmul.f32 %v700, %v1737
        %v1784 = vmul.f32 %v701, %v1738
        %v1785 = vmul.f32 %v702, %v1739
        %v1786 = vmul.f32 %v703, %v1740
        %v1787 = vmul.f32 %v704, %v1741
        %v1788 = vmul.f32 %v713, %v1558
        %v1789 = vmul.f32 %v714, %v1560
        %v1790 = vmul.f32 %v715, %v1578
        %v1791 = vmul.f32 %v716, %v1580
        %v1792 = vmul.f32 %v717, %v1598
        %v1793 = vmul.f32 %v718, %v1600
        %v1794 = vmul.f32 %v719, %v1618
        %v1795 = vmul.f32 %v720, %v1620
        %v1796 = vsub.f32 %v1780, %v1788
        %v1797 = vsub.f32 %v1781, %v1789
        %v1798 = vsub.f32 %v1782, %v1790
        %v1799 = vsub.f32 %v1783, %v1791
        %v1800 = vsub.f32 %v1784, %v1792
        %v1801 = vsub.f32 %v1785, %v1793
        %v1802 = vsub.f32 %v1786, %v1794
        %v1803 = vsub.f32 %v1787, %v1795
        %v1804 = vsel %vm788, %v1796, 0.0
        %v1805 = vsel %vm788, %v1798, 0.0
        %v1806 = vadd.f32 %v1804, %v1805
        %v1807 = vsel %vm788, %v1800, 0.0
        %v1808 = vadd.f32 %v1806, %v1807
        %v1809 = vsel %vm788, %v1802, 0.0
        %v1810 = vadd.f32 %v1808, %v1809
        %v1811 = vsel %vm788, %v1797, 0.0
        %v1812 = vsel %vm788, %v1799, 0.0
        %v1813 = vadd.f32 %v1811, %v1812
        %v1814 = vsel %vm788, %v1801, 0.0
        %v1815 = vadd.f32 %v1813, %v1814
        %v1816 = vsel %vm788, %v1803, 0.0
        %v1817 = vadd.f32 %v1815, %v1816
        %1818 = vst.msk [vmem:[%s615] sm:$0xff] %vm788, %v1772
        %1819 = vst.msk [vmem:[%s615 + $0x8] sm:$0xff] %vm788, %v1779
        %1820 = vst.msk [vmem:[%s622] sm:$0xff] %vm788, %v1810
        %1821 = vst.msk [vmem:[%s622 + $0x8] sm:$0xff] %vm788, %v1817
        %v1822 = vmul.f32 %v1772, %v1772
        %v1823 = vmul.f32 %v1779, %v1779
        %v1824 = vmul.f32 %v1810, %v1810
        %v1825 = vmul.f32 %v1817, %v1817
        %v1826 = vadd.f32 %v1822, %v1824
        %v1827 = vadd.f32 %v1823, %v1825
        %v1828 = vsel %vm788, %v1826, 0.0
        %v1829 = vsel %vm788, %v1827, 0.0
        %v1830 = vadd.f32 %v1828, %v1829
        %1831 = vadd.xlane.f32.xlu0 %v1830
        %v1832 = vpop.xlane.xlu0 %1831
        %v1833 = vrot.slane %v1832, 4
        %v1834 = vadd.f32 %v1832, %v1833
        %v1835 = vrot.slane %v1834, 2
        %v1836 = vadd.f32 %v1834, %v1835
        %v1837 = vrot.slane %v1836, 1
        %v1838 = vadd.f32 %v1836, %v1837
        %s1839 = vtos %v1838
        %v1840 = vmul.f32 %v1772, %v697
        %v1841 = vmul.f32 %v1779, %v698
        %v1842 = vmul.f32 %v1772, %v699
        %v1843 = vmul.f32 %v1779, %v700
        %v1844 = vmul.f32 %v1772, %v701
        %v1845 = vmul.f32 %v1779, %v702
        %v1846 = vmul.f32 %v1772, %v703
        %v1847 = vmul.f32 %v1779, %v704
        %v1848 = vmul.f32 %v1810, %v713
        %v1849 = vmul.f32 %v1817, %v714
        %v1850 = vmul.f32 %v1810, %v715
        %v1851 = vmul.f32 %v1817, %v716
        %v1852 = vmul.f32 %v1810, %v717
        %v1853 = vmul.f32 %v1817, %v718
        %v1854 = vmul.f32 %v1810, %v719
        %v1855 = vmul.f32 %v1817, %v720
        %v1856 = vsub.f32 %v1840, %v1848
        %v1857 = vsub.f32 %v1841, %v1849
        %v1858 = vsub.f32 %v1842, %v1850
        %v1859 = vsub.f32 %v1843, %v1851
        %v1860 = vsub.f32 %v1844, %v1852
        %v1861 = vsub.f32 %v1845, %v1853
        %v1862 = vsub.f32 %v1846, %v1854
        %v1863 = vsub.f32 %v1847, %v1855
        %v1864 = vpack.c.bf16 %v1856, %v1856
        %v1865 = vpack.c.bf16 %v1857, %v1857
        %v1866 = vpack.c.bf16 %v1858, %v1858
        %v1867 = vpack.c.bf16 %v1859, %v1859
        %v1868 = vpack.c.bf16 %v1860, %v1860
        %v1869 = vpack.c.bf16 %v1861, %v1861
        %v1870 = vpack.c.bf16 %v1862, %v1862
        %v1871 = vpack.c.bf16 %v1863, %v1863
        %v1872 = vmul.f32 %v1772, %v713
        %v1873 = vmul.f32 %v1779, %v714
        %v1874 = vmul.f32 %v1772, %v715
        %v1875 = vmul.f32 %v1779, %v716
        %v1876 = vmul.f32 %v1772, %v717
        %v1877 = vmul.f32 %v1779, %v718
        %v1878 = vmul.f32 %v1772, %v719
        %v1879 = vmul.f32 %v1779, %v720
        %v1880 = vmul.f32 %v1810, %v697
        %v1881 = vmul.f32 %v1817, %v698
        %v1882 = vmul.f32 %v1810, %v699
        %v1883 = vmul.f32 %v1817, %v700
        %v1884 = vmul.f32 %v1810, %v701
        %v1885 = vmul.f32 %v1817, %v702
        %v1886 = vmul.f32 %v1810, %v703
        %v1887 = vmul.f32 %v1817, %v704
        %v1888 = vadd.f32 %v1872, %v1880
        %v1889 = vadd.f32 %v1873, %v1881
        %v1890 = vadd.f32 %v1874, %v1882
        %v1891 = vadd.f32 %v1875, %v1883
        %v1892 = vadd.f32 %v1876, %v1884
        %v1893 = vadd.f32 %v1877, %v1885
        %v1894 = vadd.f32 %v1878, %v1886
        %v1895 = vadd.f32 %v1879, %v1887
        %v1896 = vpack.c.bf16 %v1888, %v1888
        %v1897 = vpack.c.bf16 %v1889, %v1889
        %v1898 = vpack.c.bf16 %v1890, %v1890
        %v1899 = vpack.c.bf16 %v1891, %v1891
        %v1900 = vpack.c.bf16 %v1892, %v1892
        %v1901 = vpack.c.bf16 %v1893, %v1893
        %v1902 = vpack.c.bf16 %v1894, %v1894
        %v1903 = vpack.c.bf16 %v1895, %v1895
        %v1906 = vunpack.c.l.b16 %v1864
        %v1907 = vunpack.c.l.b16 %v1865
        %v1908 = vpack.c.b16 %v1907, %v1906
        %1910 = vmatpush.bf16.msra.mxu0 0
        %1911 = vmatpush.bf16.msra.mxu0 0
        %1912 = vmatpush.bf16.msra.mxu0 0
        %1913 = vmatpush.bf16.msra.mxu0 0
        %1914 = vmatpush.bf16.msra.mxu0 0
        %1915 = vmatpush.bf16.msra.mxu0 0
        %1916 = vmatpush.bf16.msra.mxu0 0
        %1917 = vmatpush.bf16.msra.mxu0 %v1908
        %1918 = vmatmul.bf16.gmra.mxu0 %v790
        %v1919 = vpop.f32.mrf.mxu0
        %v1920 = vadd.f32 0.0, %v1919
        %v1921 = vpop.f32.mrf.mxu0
        %v1922 = vadd.f32 0.0, %v1921
        %1923 = vdwg.mxu0
        %v1926 = vunpack.c.l.b16 %v1866
        %v1927 = vunpack.c.l.b16 %v1867
        %v1928 = vpack.c.b16 %v1927, %v1926
        %1930 = vmatpush.bf16.msra.mxu0 0
        %1931 = vmatpush.bf16.msra.mxu0 0
        %1932 = vmatpush.bf16.msra.mxu0 0
        %1933 = vmatpush.bf16.msra.mxu0 0
        %1934 = vmatpush.bf16.msra.mxu0 0
        %1935 = vmatpush.bf16.msra.mxu0 0
        %1936 = vmatpush.bf16.msra.mxu0 0
        %1937 = vmatpush.bf16.msra.mxu0 %v1928
        %1938 = vmatmul.bf16.gmra.mxu0 %v790
        %v1939 = vpop.f32.mrf.mxu0
        %v1940 = vadd.f32 0.0, %v1939
        %v1941 = vpop.f32.mrf.mxu0
        %v1942 = vadd.f32 0.0, %v1941
        %1943 = vdwg.mxu0
        %v1946 = vunpack.c.l.b16 %v1868
        %v1947 = vunpack.c.l.b16 %v1869
        %v1948 = vpack.c.b16 %v1947, %v1946
        %1950 = vmatpush.bf16.msra.mxu0 0
        %1951 = vmatpush.bf16.msra.mxu0 0
        %1952 = vmatpush.bf16.msra.mxu0 0
        %1953 = vmatpush.bf16.msra.mxu0 0
        %1954 = vmatpush.bf16.msra.mxu0 0
        %1955 = vmatpush.bf16.msra.mxu0 0
        %1956 = vmatpush.bf16.msra.mxu0 0
        %1957 = vmatpush.bf16.msra.mxu0 %v1948
        %1958 = vmatmul.bf16.gmra.mxu0 %v790
        %v1959 = vpop.f32.mrf.mxu0
        %v1960 = vadd.f32 0.0, %v1959
        %v1961 = vpop.f32.mrf.mxu0
        %v1962 = vadd.f32 0.0, %v1961
        %1963 = vdwg.mxu0
        %v1966 = vunpack.c.l.b16 %v1870
        %v1967 = vunpack.c.l.b16 %v1871
        %v1968 = vpack.c.b16 %v1967, %v1966
        %1970 = vmatpush.bf16.msra.mxu0 0
        %1971 = vmatpush.bf16.msra.mxu0 0
        %1972 = vmatpush.bf16.msra.mxu0 0
        %1973 = vmatpush.bf16.msra.mxu0 0
        %1974 = vmatpush.bf16.msra.mxu0 0
        %1975 = vmatpush.bf16.msra.mxu0 0
        %1976 = vmatpush.bf16.msra.mxu0 0
        %1977 = vmatpush.bf16.msra.mxu0 %v1968
        %1978 = vmatmul.bf16.gmra.mxu0 %v790
        %v1979 = vpop.f32.mrf.mxu0
        %v1980 = vadd.f32 0.0, %v1979
        %v1981 = vpop.f32.mrf.mxu0
        %v1982 = vadd.f32 0.0, %v1981
        %1983 = vdwg.mxu0
        %v1986 = vunpack.c.l.b16 %v1896
        %v1987 = vunpack.c.l.b16 %v1897
        %v1988 = vpack.c.b16 %v1987, %v1986
        %1990 = vmatpush.bf16.msra.mxu0 0
        %1991 = vmatpush.bf16.msra.mxu0 0
        %1992 = vmatpush.bf16.msra.mxu0 0
        %1993 = vmatpush.bf16.msra.mxu0 0
        %1994 = vmatpush.bf16.msra.mxu0 0
        %1995 = vmatpush.bf16.msra.mxu0 0
        %1996 = vmatpush.bf16.msra.mxu0 0
        %1997 = vmatpush.bf16.msra.mxu0 %v1988
        %1998 = vmatmul.bf16.gmra.mxu0 %v878
        %v1999 = vpop.f32.mrf.mxu0
        %v2000 = vadd.f32 0.0, %v1999
        %v2001 = vpop.f32.mrf.mxu0
        %v2002 = vadd.f32 0.0, %v2001
        %2003 = vdwg.mxu0
        %v2006 = vunpack.c.l.b16 %v1898
        %v2007 = vunpack.c.l.b16 %v1899
        %v2008 = vpack.c.b16 %v2007, %v2006
        %2010 = vmatpush.bf16.msra.mxu0 0
        %2011 = vmatpush.bf16.msra.mxu0 0
        %2012 = vmatpush.bf16.msra.mxu0 0
        %2013 = vmatpush.bf16.msra.mxu0 0
        %2014 = vmatpush.bf16.msra.mxu0 0
        %2015 = vmatpush.bf16.msra.mxu0 0
        %2016 = vmatpush.bf16.msra.mxu0 0
        %2017 = vmatpush.bf16.msra.mxu0 %v2008
        %2018 = vmatmul.bf16.gmra.mxu0 %v878
        %v2019 = vpop.f32.mrf.mxu0
        %v2020 = vadd.f32 0.0, %v2019
        %v2021 = vpop.f32.mrf.mxu0
        %v2022 = vadd.f32 0.0, %v2021
        %2023 = vdwg.mxu0
        %v2026 = vunpack.c.l.b16 %v1900
        %v2027 = vunpack.c.l.b16 %v1901
        %v2028 = vpack.c.b16 %v2027, %v2026
        %2030 = vmatpush.bf16.msra.mxu0 0
        %2031 = vmatpush.bf16.msra.mxu0 0
        %2032 = vmatpush.bf16.msra.mxu0 0
        %2033 = vmatpush.bf16.msra.mxu0 0
        %2034 = vmatpush.bf16.msra.mxu0 0
        %2035 = vmatpush.bf16.msra.mxu0 0
        %2036 = vmatpush.bf16.msra.mxu0 0
        %2037 = vmatpush.bf16.msra.mxu0 %v2028
        %2038 = vmatmul.bf16.gmra.mxu0 %v878
        %v2039 = vpop.f32.mrf.mxu0
        %v2040 = vadd.f32 0.0, %v2039
        %v2041 = vpop.f32.mrf.mxu0
        %v2042 = vadd.f32 0.0, %v2041
        %2043 = vdwg.mxu0
        %v2046 = vunpack.c.l.b16 %v1902
        %v2047 = vunpack.c.l.b16 %v1903
        %v2048 = vpack.c.b16 %v2047, %v2046
        %2050 = vmatpush.bf16.msra.mxu0 0
        %2051 = vmatpush.bf16.msra.mxu0 0
        %2052 = vmatpush.bf16.msra.mxu0 0
        %2053 = vmatpush.bf16.msra.mxu0 0
        %2054 = vmatpush.bf16.msra.mxu0 0
        %2055 = vmatpush.bf16.msra.mxu0 0
        %2056 = vmatpush.bf16.msra.mxu0 0
        %2057 = vmatpush.bf16.msra.mxu0 %v2048
        %2058 = vmatmul.bf16.gmra.mxu0 %v878
        %v2059 = vpop.f32.mrf.mxu0
        %v2060 = vadd.f32 0.0, %v2059
        %v2061 = vpop.f32.mrf.mxu0
        %v2062 = vadd.f32 0.0, %v2061
        %2063 = vdwg.mxu0
        %v2064 = vsub.f32 %v1920, %v2000
        %v2065 = vsub.f32 %v1922, %v2002
        %v2066 = vsub.f32 %v1940, %v2020
        %v2067 = vsub.f32 %v1942, %v2022
        %v2068 = vsub.f32 %v1960, %v2040
        %v2069 = vsub.f32 %v1962, %v2042
        %v2070 = vsub.f32 %v1980, %v2060
        %v2071 = vsub.f32 %v1982, %v2062
        %2072 = vmatpush.bf16.msra.mxu0 0
        %2073 = vmatpush.bf16.msra.mxu0 0
        %2074 = vmatpush.bf16.msra.mxu0 0
        %2075 = vmatpush.bf16.msra.mxu0 0
        %2076 = vmatpush.bf16.msra.mxu0 0
        %2077 = vmatpush.bf16.msra.mxu0 0
        %2078 = vmatpush.bf16.msra.mxu0 0
        %2079 = vmatpush.bf16.msra.mxu0 %v1908
        %2080 = vmatmul.bf16.gmra.mxu0 %v878
        %v2081 = vpop.f32.mrf.mxu0
        %v2082 = vadd.f32 0.0, %v2081
        %v2083 = vpop.f32.mrf.mxu0
        %v2084 = vadd.f32 0.0, %v2083
        %2085 = vdwg.mxu0
        %2086 = vmatpush.bf16.msra.mxu0 0
        %2087 = vmatpush.bf16.msra.mxu0 0
        %2088 = vmatpush.bf16.msra.mxu0 0
        %2089 = vmatpush.bf16.msra.mxu0 0
        %2090 = vmatpush.bf16.msra.mxu0 0
        %2091 = vmatpush.bf16.msra.mxu0 0
        %2092 = vmatpush.bf16.msra.mxu0 0
        %2093 = vmatpush.bf16.msra.mxu0 %v1928
        %2094 = vmatmul.bf16.gmra.mxu0 %v878
        %v2095 = vpop.f32.mrf.mxu0
        %v2096 = vadd.f32 0.0, %v2095
        %v2097 = vpop.f32.mrf.mxu0
        %v2098 = vadd.f32 0.0, %v2097
        %2099 = vdwg.mxu0
        %2100 = vmatpush.bf16.msra.mxu0 0
        %2101 = vmatpush.bf16.msra.mxu0 0
        %2102 = vmatpush.bf16.msra.mxu0 0
        %2103 = vmatpush.bf16.msra.mxu0 0
        %2104 = vmatpush.bf16.msra.mxu0 0
        %2105 = vmatpush.bf16.msra.mxu0 0
        %2106 = vmatpush.bf16.msra.mxu0 0
        %2107 = vmatpush.bf16.msra.mxu0 %v1948
        %2108 = vmatmul.bf16.gmra.mxu0 %v878
        %v2109 = vpop.f32.mrf.mxu0
        %v2110 = vadd.f32 0.0, %v2109
        %v2111 = vpop.f32.mrf.mxu0
        %v2112 = vadd.f32 0.0, %v2111
        %2113 = vdwg.mxu0
        %2114 = vmatpush.bf16.msra.mxu0 0
        %2115 = vmatpush.bf16.msra.mxu0 0
        %2116 = vmatpush.bf16.msra.mxu0 0
        %2117 = vmatpush.bf16.msra.mxu0 0
        %2118 = vmatpush.bf16.msra.mxu0 0
        %2119 = vmatpush.bf16.msra.mxu0 0
        %2120 = vmatpush.bf16.msra.mxu0 0
        %2121 = vmatpush.bf16.msra.mxu0 %v1968
        %2122 = vmatmul.bf16.gmra.mxu0 %v878
        %v2123 = vpop.f32.mrf.mxu0
        %v2124 = vadd.f32 0.0, %v2123
        %v2125 = vpop.f32.mrf.mxu0
        %v2126 = vadd.f32 0.0, %v2125
        %2127 = vdwg.mxu0
        %2128 = vmatpush.bf16.msra.mxu0 0
        %2129 = vmatpush.bf16.msra.mxu0 0
        %2130 = vmatpush.bf16.msra.mxu0 0
        %2131 = vmatpush.bf16.msra.mxu0 0
        %2132 = vmatpush.bf16.msra.mxu0 0
        %2133 = vmatpush.bf16.msra.mxu0 0
        %2134 = vmatpush.bf16.msra.mxu0 0
        %2135 = vmatpush.bf16.msra.mxu0 %v1988
        %2136 = vmatmul.bf16.gmra.mxu0 %v790
        %v2137 = vpop.f32.mrf.mxu0
        %v2138 = vadd.f32 %v2082, %v2137
        %v2139 = vpop.f32.mrf.mxu0
        %v2140 = vadd.f32 %v2084, %v2139
        %2141 = vdwg.mxu0
        %2142 = vmatpush.bf16.msra.mxu0 0
        %2143 = vmatpush.bf16.msra.mxu0 0
        %2144 = vmatpush.bf16.msra.mxu0 0
        %2145 = vmatpush.bf16.msra.mxu0 0
        %2146 = vmatpush.bf16.msra.mxu0 0
        %2147 = vmatpush.bf16.msra.mxu0 0
        %2148 = vmatpush.bf16.msra.mxu0 0
        %2149 = vmatpush.bf16.msra.mxu0 %v2008
        %2150 = vmatmul.bf16.gmra.mxu0 %v790
        %v2151 = vpop.f32.mrf.mxu0
        %v2152 = vadd.f32 %v2096, %v2151
        %v2153 = vpop.f32.mrf.mxu0
        %v2154 = vadd.f32 %v2098, %v2153
        %2155 = vdwg.mxu0
        %2156 = vmatpush.bf16.msra.mxu0 0
        %2157 = vmatpush.bf16.msra.mxu0 0
        %2158 = vmatpush.bf16.msra.mxu0 0
        %2159 = vmatpush.bf16.msra.mxu0 0
        %2160 = vmatpush.bf16.msra.mxu0 0
        %2161 = vmatpush.bf16.msra.mxu0 0
        %2162 = vmatpush.bf16.msra.mxu0 0
        %2163 = vmatpush.bf16.msra.mxu0 %v2028
        %2164 = vmatmul.bf16.gmra.mxu0 %v790
        %v2165 = vpop.f32.mrf.mxu0
        %v2166 = vadd.f32 %v2110, %v2165
        %v2167 = vpop.f32.mrf.mxu0
        %v2168 = vadd.f32 %v2112, %v2167
        %2169 = vdwg.mxu0
        %2170 = vmatpush.bf16.msra.mxu0 0
        %2171 = vmatpush.bf16.msra.mxu0 0
        %2172 = vmatpush.bf16.msra.mxu0 0
        %2173 = vmatpush.bf16.msra.mxu0 0
        %2174 = vmatpush.bf16.msra.mxu0 0
        %2175 = vmatpush.bf16.msra.mxu0 0
        %2176 = vmatpush.bf16.msra.mxu0 0
        %2177 = vmatpush.bf16.msra.mxu0 %v2048
        %2178 = vmatmul.bf16.gmra.mxu0 %v790
        %v2179 = vpop.f32.mrf.mxu0
        %v2180 = vadd.f32 %v2124, %v2179
        %v2181 = vpop.f32.mrf.mxu0
        %v2182 = vadd.f32 %v2126, %v2181
        %2183 = vdwg.mxu0
        %v2184 = vpack.c.bf16 %v2065, %v2064
        %v2185 = vpack.c.bf16 %v2067, %v2066
        %v2186 = vpack.c.bf16 %v2069, %v2068
        %v2187 = vpack.c.bf16 %v2071, %v2070
        %v2188 = vpack.c.bf16 %v2140, %v2138
        %v2189 = vpack.c.bf16 %v2154, %v2152
        %v2190 = vpack.c.bf16 %v2168, %v2166
        %v2191 = vpack.c.bf16 %v2182, %v2180
        %v2193 = vsel %vm788, %v2184, 0
        %v2196 = vsel %vm788, %v2185, 0
        %v2199 = vsel %vm788, %v2186, 0
        %v2202 = vsel %vm788, %v2187, 0
        %2204 = vmatpush.bf16.msra.mxu0 0
        %2205 = vmatpush.bf16.msra.mxu0 0
        %2206 = vmatpush.bf16.msra.mxu0 0
        %2207 = vmatpush.bf16.msra.mxu0 0
        %2208 = vmatpush.bf16.msra.mxu0 0
        %2209 = vmatpush.bf16.msra.mxu0 0
        %2210 = vmatpush.bf16.msra.mxu0 0
        %2211 = vmatpush.bf16.msra.mxu0 %v1086
        %2212 = vmatmul.bf16.gmra.mxu0 %v2193
        %v2213 = vpop.f32.mrf.mxu0
        %v2214 = vadd.f32 0.0, %v2213
        %v2215 = vpop.f32.mrf.mxu0
        %v2216 = vadd.f32 0.0, %v2215
        %2217 = vmatmul.bf16.gmra.mxu0 %v2196
        %v2218 = vpop.f32.mrf.mxu0
        %v2219 = vadd.f32 0.0, %v2218
        %v2220 = vpop.f32.mrf.mxu0
        %v2221 = vadd.f32 0.0, %v2220
        %2222 = vmatmul.bf16.gmra.mxu0 %v2199
        %v2223 = vpop.f32.mrf.mxu0
        %v2224 = vadd.f32 0.0, %v2223
        %v2225 = vpop.f32.mrf.mxu0
        %v2226 = vadd.f32 0.0, %v2225
        %2227 = vmatmul.bf16.gmra.mxu0 %v2202
        %v2228 = vpop.f32.mrf.mxu0
        %v2229 = vadd.f32 0.0, %v2228
        %v2230 = vpop.f32.mrf.mxu0
        %v2231 = vadd.f32 0.0, %v2230
        %2232 = vdwg.mxu0
        %v2234 = vsel %vm788, %v2188, 0
        %v2237 = vsel %vm788, %v2189, 0
        %v2240 = vsel %vm788, %v2190, 0
        %v2243 = vsel %vm788, %v2191, 0
        %2245 = vmatpush.bf16.msra.mxu0 0
        %2246 = vmatpush.bf16.msra.mxu0 0
        %2247 = vmatpush.bf16.msra.mxu0 0
        %2248 = vmatpush.bf16.msra.mxu0 0
        %2249 = vmatpush.bf16.msra.mxu0 0
        %2250 = vmatpush.bf16.msra.mxu0 0
        %2251 = vmatpush.bf16.msra.mxu0 0
        %2252 = vmatpush.bf16.msra.mxu0 %v1133
        %2253 = vmatmul.bf16.gmra.mxu0 %v2234
        %v2254 = vpop.f32.mrf.mxu0
        %v2255 = vadd.f32 0.0, %v2254
        %v2256 = vpop.f32.mrf.mxu0
        %v2257 = vadd.f32 0.0, %v2256
        %2258 = vmatmul.bf16.gmra.mxu0 %v2237
        %v2259 = vpop.f32.mrf.mxu0
        %v2260 = vadd.f32 0.0, %v2259
        %v2261 = vpop.f32.mrf.mxu0
        %v2262 = vadd.f32 0.0, %v2261
        %2263 = vmatmul.bf16.gmra.mxu0 %v2240
        %v2264 = vpop.f32.mrf.mxu0
        %v2265 = vadd.f32 0.0, %v2264
        %v2266 = vpop.f32.mrf.mxu0
        %v2267 = vadd.f32 0.0, %v2266
        %2268 = vmatmul.bf16.gmra.mxu0 %v2243
        %v2269 = vpop.f32.mrf.mxu0
        %v2270 = vadd.f32 0.0, %v2269
        %v2271 = vpop.f32.mrf.mxu0
        %v2272 = vadd.f32 0.0, %v2271
        %2273 = vdwg.mxu0
        %v2274 = vsub.f32 %v2214, %v2255
        %v2275 = vsub.f32 %v2216, %v2257
        %v2276 = vsub.f32 %v2219, %v2260
        %v2277 = vsub.f32 %v2221, %v2262
        %v2278 = vsub.f32 %v2224, %v2265
        %v2279 = vsub.f32 %v2226, %v2267
        %v2280 = vsub.f32 %v2229, %v2270
        %v2281 = vsub.f32 %v2231, %v2272
        %2282 = vmatpush.bf16.msra.mxu0 0
        %2283 = vmatpush.bf16.msra.mxu0 0
        %2284 = vmatpush.bf16.msra.mxu0 0
        %2285 = vmatpush.bf16.msra.mxu0 0
        %2286 = vmatpush.bf16.msra.mxu0 0
        %2287 = vmatpush.bf16.msra.mxu0 0
        %2288 = vmatpush.bf16.msra.mxu0 0
        %2289 = vmatpush.bf16.msra.mxu0 %v1086
        %2290 = vmatmul.bf16.gmra.mxu0 %v2234
        %v2291 = vpop.f32.mrf.mxu0
        %v2292 = vadd.f32 0.0, %v2291
        %v2293 = vpop.f32.mrf.mxu0
        %v2294 = vadd.f32 0.0, %v2293
        %2295 = vmatmul.bf16.gmra.mxu0 %v2237
        %v2296 = vpop.f32.mrf.mxu0
        %v2297 = vadd.f32 0.0, %v2296
        %v2298 = vpop.f32.mrf.mxu0
        %v2299 = vadd.f32 0.0, %v2298
        %2300 = vmatmul.bf16.gmra.mxu0 %v2240
        %v2301 = vpop.f32.mrf.mxu0
        %v2302 = vadd.f32 0.0, %v2301
        %v2303 = vpop.f32.mrf.mxu0
        %v2304 = vadd.f32 0.0, %v2303
        %2305 = vmatmul.bf16.gmra.mxu0 %v2243
        %v2306 = vpop.f32.mrf.mxu0
        %v2307 = vadd.f32 0.0, %v2306
        %v2308 = vpop.f32.mrf.mxu0
        %v2309 = vadd.f32 0.0, %v2308
        %2310 = vdwg.mxu0
        %2311 = vmatpush.bf16.msra.mxu0 0
        %2312 = vmatpush.bf16.msra.mxu0 0
        %2313 = vmatpush.bf16.msra.mxu0 0
        %2314 = vmatpush.bf16.msra.mxu0 0
        %2315 = vmatpush.bf16.msra.mxu0 0
        %2316 = vmatpush.bf16.msra.mxu0 0
        %2317 = vmatpush.bf16.msra.mxu0 0
        %2318 = vmatpush.bf16.msra.mxu0 %v1133
        %2319 = vmatmul.bf16.gmra.mxu0 %v2193
        %v2320 = vpop.f32.mrf.mxu0
        %v2321 = vadd.f32 %v2292, %v2320
        %v2322 = vpop.f32.mrf.mxu0
        %v2323 = vadd.f32 %v2294, %v2322
        %2324 = vmatmul.bf16.gmra.mxu0 %v2196
        %v2325 = vpop.f32.mrf.mxu0
        %v2326 = vadd.f32 %v2297, %v2325
        %v2327 = vpop.f32.mrf.mxu0
        %v2328 = vadd.f32 %v2299, %v2327
        %2329 = vmatmul.bf16.gmra.mxu0 %v2199
        %v2330 = vpop.f32.mrf.mxu0
        %v2331 = vadd.f32 %v2302, %v2330
        %v2332 = vpop.f32.mrf.mxu0
        %v2333 = vadd.f32 %v2304, %v2332
        %2334 = vmatmul.bf16.gmra.mxu0 %v2202
        %v2335 = vpop.f32.mrf.mxu0
        %v2336 = vadd.f32 %v2307, %v2335
        %v2337 = vpop.f32.mrf.mxu0
        %v2338 = vadd.f32 %v2309, %v2337
        %2339 = vdwg.mxu0
        %v2340 = vmul.f32 %v2274, %v687
        %v2341 = vmul.f32 %v2275, %v688
        %v2342 = vmul.f32 %v2276, %v687
        %v2343 = vmul.f32 %v2277, %v688
        %v2344 = vmul.f32 %v2278, %v687
        %v2345 = vmul.f32 %v2279, %v688
        %v2346 = vmul.f32 %v2280, %v687
        %v2347 = vmul.f32 %v2281, %v688
        %v2348 = vmul.f32 %v2321, %v687
        %v2349 = vmul.f32 %v2323, %v688
        %v2350 = vmul.f32 %v2326, %v687
        %v2351 = vmul.f32 %v2328, %v688
        %v2352 = vmul.f32 %v2331, %v687
        %v2353 = vmul.f32 %v2333, %v688
        %v2354 = vmul.f32 %v2336, %v687
        %v2355 = vmul.f32 %v2338, %v688
        %v2356 = vmul.f32 %v2340, %v2340
        %v2357 = vmul.f32 %v2341, %v2341
        %v2358 = vmul.f32 %v2342, %v2342
        %v2359 = vmul.f32 %v2343, %v2343
        %v2360 = vmul.f32 %v2344, %v2344
        %v2361 = vmul.f32 %v2345, %v2345
        %v2362 = vmul.f32 %v2346, %v2346
        %v2363 = vmul.f32 %v2347, %v2347
        %v2364 = vmul.f32 %v2348, %v2348
        %v2365 = vmul.f32 %v2349, %v2349
        %v2366 = vmul.f32 %v2350, %v2350
        %v2367 = vmul.f32 %v2351, %v2351
        %v2368 = vmul.f32 %v2352, %v2352
        %v2369 = vmul.f32 %v2353, %v2353
        %v2370 = vmul.f32 %v2354, %v2354
        %v2371 = vmul.f32 %v2355, %v2355
        %v2372 = vadd.f32 %v2356, %v2364
        %v2373 = vadd.f32 %v2357, %v2365
        %v2374 = vadd.f32 %v2358, %v2366
        %v2375 = vadd.f32 %v2359, %v2367
        %v2376 = vadd.f32 %v2360, %v2368
        %v2377 = vadd.f32 %v2361, %v2369
        %v2378 = vadd.f32 %v2362, %v2370
        %v2379 = vadd.f32 %v2363, %v2371
        %v2380 = vsel %vm788, %v2372, 0.0
        %v2381 = vsel %vm788, %v2373, 0.0
        %v2382 = vadd.f32 %v2380, %v2381
        %v2383 = vsel %vm788, %v2374, 0.0
        %v2384 = vadd.f32 %v2382, %v2383
        %v2385 = vsel %vm788, %v2375, 0.0
        %v2386 = vadd.f32 %v2384, %v2385
        %v2387 = vsel %vm788, %v2376, 0.0
        %v2388 = vadd.f32 %v2386, %v2387
        %v2389 = vsel %vm788, %v2377, 0.0
        %v2390 = vadd.f32 %v2388, %v2389
        %v2391 = vsel %vm788, %v2378, 0.0
        %v2392 = vadd.f32 %v2390, %v2391
        %v2393 = vsel %vm788, %v2379, 0.0
        %v2394 = vadd.f32 %v2392, %v2393
        %2395 = vadd.xlane.f32.xlu0 %v2394
        %v2396 = vpop.xlane.xlu0 %2395
        %v2397 = vrot.slane %v2396, 4
        %v2398 = vadd.f32 %v2396, %v2397
        %v2399 = vrot.slane %v2398, 2
        %v2400 = vadd.f32 %v2398, %v2399
        %v2401 = vrot.slane %v2400, 1
        %v2402 = vadd.f32 %v2400, %v2401
        %s2403 = vtos %v2402
        %v2404 = vstv %s1839
        %v2405 = vstv %s2403
        %vm2406 = vcmask 1040384
        %v2407 = vsel %vm2406, %v2404, %v2405
        %2408 = vst [vmem:[%s629] sm:$0x3] %v2407
        %s2409 = sand.u32 %s307, 1
        %s2410 = scalar_lea.sflag [#allocation4], %s2409
        %s2411 = sand.u32 %s307, 1
        %s2412 = smul.addr %s2411, 16
        %s2413 = scalar_lea.vmem [#allocation11], %s2412
        %s2414 = sand.u32 %s38, 1
        %s2415 = scalar_lea.sflag [#allocation13], %s2414
        %s2416 = sand.u32 %s333, 1
        %s2417 = smul.addr %s2416, 16
        %s2418 = scalar_lea.vmem [#allocation12], %s2417
        %s2419 = sand.u32 %s38, 1
        %s2420 = scalar_lea.sflag [#allocation13], %s2419
        %s2421 = sand.u32 %s359, 1
        %s2422 = smul.addr %s2421, 2
        %s2423 = scalar_lea.vmem [#allocation14], %s2422
        // Predicated region
        $region85: #{tpu_custom_call.1} parent=63 // pred_check
          %p2424 = pneg %p317
        $region86: #{tpu_custom_call.1} parent=63 // pred_check_branch
          %2426 = sbr.rel (%p2424) target = $region88
        $region87: #{tpu_custom_call.1} parent=63 // pred_region
          %2428 = vsyncadd %s2410, 0
          %s2429 = smul.addr %s38, 2
          %s2430 = smul.addr %s2429, 8
          %s2431 = scalar_lea.hbm %s11, %s2430
          %s2432 = sshll.u32 %s2413, 4
          %s2433 = int_to_ptr.vmem [resolvable:$true] %s2432
          %s2434 = sshll.u32 %s2431, 4
          %s2435 = int_to_ptr.hbm [resolvable:$true] %s2434
          %2440 = dma.vmem_to_hbm [thread:$0]  %s2433, 256, %s2435, %s2410, 128, 128, 8
        $region88: #{tpu_custom_call.1} parent=63 // pred_fallthru
          _
        // Predicated region
        $region89: #{tpu_custom_call.1} parent=63 // pred_check
          %p2441 = pneg %p343
        $region90: #{tpu_custom_call.1} parent=63 // pred_check_branch
          %2443 = sbr.rel (%p2441) target = $region92
        $region91: #{tpu_custom_call.1} parent=63 // pred_region
          %2445 = vsyncadd %s2415, 0
          %s2446 = smul.addr %s38, 2
          %s2447 = smul.addr %s2446, 8
          %s2448 = scalar_lea.hbm %s12, %s2447
          %s2449 = sshll.u32 %s2418, 4
          %s2450 = int_to_ptr.vmem [resolvable:$true] %s2449
          %s2451 = sshll.u32 %s2448, 4
          %s2452 = int_to_ptr.hbm [resolvable:$true] %s2451
          %2457 = dma.vmem_to_hbm [thread:$0]  %s2450, 256, %s2452, %s2415, 128, 128, 8
        $region92: #{tpu_custom_call.1} parent=63 // pred_fallthru
          _
        // Predicated region
        $region93: #{tpu_custom_call.1} parent=63 // pred_check
          %p2458 = pneg %p369
        $region94: #{tpu_custom_call.1} parent=63 // pred_check_branch
          %2460 = sbr.rel (%p2458) target = $region96
        $region95: #{tpu_custom_call.1} parent=63 // pred_region
          %2462 = vsyncadd %s2420, 0
          %s2463 = smul.addr %s38, 2
          %s2464 = scalar_lea.hbm %s13, %s2463
          %s2466 = sshll.u32 %s2423, 4
          %s2467 = int_to_ptr.vmem [resolvable:$true] %s2466
          %s2468 = sshll.u32 %s2464, 4
          %s2469 = int_to_ptr.hbm [resolvable:$true] %s2468
          %2471 = dma.vmem_to_hbm [thread:$0]  %s2467, 32, %s2469, %s2420
        $region96: #{tpu_custom_call.1} parent=63 // pred_fallthru
          _
      $region64: #{tpu_custom_call.1} parent=5 // pred_fallthru
        _
      %p2472 = scmp.le.s32.totalorder 2, %s33
      // Predicated region
      $region97: #{tpu_custom_call.1} parent=5 // pred_check
        %p2473 = pneg %p2472
      $region98: #{tpu_custom_call.1} parent=5 // pred_check_branch
        %2475 = sbr.rel (%p2473) target = $region100
      $region99: #{tpu_custom_call.1} parent=5 // pred_region
        %s2476 = ssub.s32 %s33, 2
        // Predicated region
        $region101: #{tpu_custom_call.1} parent=99 // pred_check
          %p2477 = pneg %p323
        $region102: #{tpu_custom_call.1} parent=99 // pred_check_branch
          %2479 = sbr.rel (%p2477) target = $region104
        $region103: #{tpu_custom_call.1} parent=99 // pred_region
          %s2480 = sand.u32 %s308, 1
          %s2481 = scalar_lea.sflag [#allocation4], %s2480
          %s2482 = sand.u32 %s308, 1
          %s2483 = smul.addr %s2482, 16
          %s2484 = scalar_lea.vmem [#allocation11], %s2483
          %2486 = dma.done %s2481, 256
        $region104: #{tpu_custom_call.1} parent=99 // pred_fallthru
          _
        // Predicated region
        $region105: #{tpu_custom_call.1} parent=99 // pred_check
          %p2487 = pneg %p349
        $region106: #{tpu_custom_call.1} parent=99 // pred_check_branch
          %2489 = sbr.rel (%p2487) target = $region108
        $region107: #{tpu_custom_call.1} parent=99 // pred_region
          %s2490 = sand.u32 %s39, 1
          %s2491 = scalar_lea.sflag [#allocation13], %s2490
          %s2492 = sand.u32 %s334, 1
          %s2493 = smul.addr %s2492, 16
          %s2494 = scalar_lea.vmem [#allocation12], %s2493
          %2496 = dma.done %s2491, 256
        $region108: #{tpu_custom_call.1} parent=99 // pred_fallthru
          _
        // Predicated region
        $region109: #{tpu_custom_call.1} parent=99 // pred_check
          %p2497 = pneg %p375
        $region110: #{tpu_custom_call.1} parent=99 // pred_check_branch
          %2499 = sbr.rel (%p2497) target = $region112
        $region111: #{tpu_custom_call.1} parent=99 // pred_region
          %s2500 = sand.u32 %s39, 1
          %s2501 = scalar_lea.sflag [#allocation13], %s2500
          %s2502 = sand.u32 %s360, 1
          %s2503 = smul.addr %s2502, 2
          %s2504 = scalar_lea.vmem [#allocation14], %s2503
          %2506 = dma.done %s2501, 32
        $region112: #{tpu_custom_call.1} parent=99 // pred_fallthru
          _
      $region100: #{tpu_custom_call.1} parent=5 // pred_fallthru
        _
    $region6: #{tpu_custom_call.1} parent=1 // loop_footer
      %s37 = sadd.s32 1, %s33
    $region7: #{tpu_custom_call.1} parent=1 // loop_footer_branch
      %32 = sbr.rel target = $region3
    $region8: #{tpu_custom_call.1} parent=1 // loop_exit
      _
    %2507 = vsyncpa [#allocation3], 1
    %s2508 = scalar_lea.sflag [#allocation3], 1
    %2509 = vsyncpa %s2508, 1
    %2510 = vsyncpa [#allocation6], 1
    %s2511 = scalar_lea.sflag [#allocation6], 1
    %2512 = vsyncpa %s2511, 1
    %2513 = vsyncpa [#allocation9], 1
    %2514 = vsyncpa [#allocation4], 1
    %s2515 = scalar_lea.sflag [#allocation4], 1
    %2516 = vsyncpa %s2515, 1
    %2517 = vsyncpa [#allocation13], 1
    %s2518 = scalar_lea.sflag [#allocation13], 1
    %2519 = vsyncpa %s2518, 1

</llo_original>
